<compile_context>
chip_gen: v7x
topology: tpu7x:2x2x1
jax: 0.10.0
libtpu: 0.0.40
codegen_flags: <defaults>
</compile_context>

<pallas_src>
import jax
import jax.numpy as jnp
from jax.experimental import pallas as pl
from jax.experimental.pallas import tpu as pltpu


def _round_up(n: int, m: int) -> int:
    return ((n + m - 1) // m) * m


def _num_tensorcores() -> int:
    """Best-effort TC count per chip: 2 on v7x, 1 on v5e/v6e."""
    try:
        kind = jax.devices()[0].device_kind.lower()
        return 2 if "v7" in kind else 1
    except Exception:  # pragma: no cover - defensive only
        return 1


def _latent_opt_kernel(x_ref, w1_ref, b1_ref, w2_ref, b2_ref, o_ref):
    x = x_ref[...]                                            # (TB, D)
    # hidden = ReLU(x @ W1 + b1)   -- MXU matmul, f32 accumulate
    h = jnp.dot(x, w1_ref[...], preferred_element_type=jnp.float32)
    h = jnp.maximum(h + b1_ref[...], 0.0)                     # (TB, H)
    # delta = h @ W2 + b2          -- keep layer-1 accumulator in f32
    d = jnp.dot(h, w2_ref[...], preferred_element_type=jnp.float32)
    d = d + b2_ref[...]                                       # (TB, D)
    # residual: y = x + delta
    o_ref[...] = (x.astype(jnp.float32) + d).astype(o_ref.dtype)


def latent_optimizer(x, w1, b1_2d, w2, b2_2d, *, num_batch_tiles=None):
    """x: (B, latent_dim); w1: (latent_dim, 512); b1_2d: (1, 512);
       w2: (512, latent_dim); b2_2d: (1, latent_dim).
       Weights are in (in_features, out_features) layout (PyTorch Linear stores (out, in))."""
    B, D = x.shape
    H = w1.shape[1]

    if num_batch_tiles is None:
        num_batch_tiles = _num_tensorcores()
    # Minimal-padding batch tile: n balanced tiles, rounded to the f32 sublane (8).
    n = max(1, min(num_batch_tiles, pl.cdiv(B, 8)))
    TB = _round_up(pl.cdiv(B, n), 8)
    grid = (pl.cdiv(B, TB),)

    return pl.pallas_call(
        _latent_opt_kernel,
        out_shape=jax.ShapeDtypeStruct((B, D), x.dtype),
        grid_spec=pl.GridSpec(
            grid=grid,
            in_specs=[
                pl.BlockSpec((TB, D), lambda i: (i, 0)),   # x: tiled over batch
                pl.BlockSpec((D, H), lambda i: (0, 0)),    # W1: VMEM-resident
                pl.BlockSpec((1, H), lambda i: (0, 0)),    # b1: VMEM-resident
                pl.BlockSpec((H, D), lambda i: (0, 0)),    # W2: VMEM-resident
                pl.BlockSpec((1, D), lambda i: (0, 0)),    # b2: VMEM-resident
            ],
            out_specs=pl.BlockSpec((TB, D), lambda i: (i, 0)),
        ),
        compiler_params=pltpu.CompilerParams(
            dimension_semantics=("parallel",)),              # megacore split on v7x
    )(x, w1, b1_2d, w2, b2_2d)


def make_latent_optimizer(w1, b1, w2, b2):
    """Stage parameters once (model-load time) and return a jitted apply(x)."""
    b1_2d = jnp.asarray(b1).reshape(1, -1)
    b2_2d = jnp.asarray(b2).reshape(1, -1)
    n_tiles = _num_tensorcores()

    @jax.jit
    def apply(x):
        return latent_optimizer(x, w1, b1_2d, w2, b2_2d, num_batch_tiles=n_tiles)

    return apply


if __name__ == "__main__":
    B = 384        # 1 grid step on v5e/v6e (TB=384); 2 balanced steps on v7x (TB=192)
    LATENT = 32    # latent_dim
    HIDDEN = 512   # fixed by the module

    key = jax.random.PRNGKey(0)
    kx, k1, kb1, k2, kb2 = jax.random.split(key, 5)

    x = jax.random.normal(kx, (B, LATENT), dtype=jnp.float32)

    # Deterministic synthetic parameters, built directly in (in, out) layout.
    w1 = jax.random.normal(k1, (LATENT, HIDDEN), dtype=jnp.float32) * 0.05
    b1 = jax.random.normal(kb1, (HIDDEN,), dtype=jnp.float32) * 0.05
    w2 = jax.random.normal(k2, (HIDDEN, LATENT), dtype=jnp.float32) * 0.05
    b2 = jax.random.normal(kb2, (LATENT,), dtype=jnp.float32) * 0.05

    fwd = make_latent_optimizer(w1, b1, w2, b2)   # params staged once, not per call
    out = jax.block_until_ready(fwd(x))

    # Reference check in plain JAX (same math).
    ref = x + (jnp.maximum(x @ w1 + b1, 0.0) @ w2 + b2)
    assert out.shape == ref.shape, "shape mismatch vs reference"
    assert jnp.allclose(out, ref, atol=1e-4, rtol=1e-4), "mismatch vs reference"

    print("KERNEL_OK")
</pallas_src>

<mosaic_0001>
module attributes {stable_mosaic.version = 11 : i64} {
  func.func @_latent_opt_kernel(%arg0: i32, %arg1: memref<384x32xf32, #tpu.memory_space<vmem>>, %arg2: memref<32x512xf32, #tpu.memory_space<vmem>>, %arg3: memref<1x512xf32, #tpu.memory_space<vmem>>, %arg4: memref<512x32xf32, #tpu.memory_space<vmem>>, %arg5: memref<1x32xf32, #tpu.memory_space<vmem>>, %arg6: memref<384x32xf32, #tpu.memory_space<vmem>>) attributes {dimension_semantics = [#tpu.dimension_semantics<parallel>], iteration_bounds = array<i64: 1>, scalar_prefetch = 0 : i64, scratch_operands = 0 : i64, tpu.core_type = #tpu.core_type<tc>, window_params = [{transform_indices = @transform_0, window_bounds = array<i64: 384, 32>}, {pipeline_mode = #tpu.pipeline_mode<synchronous>, transform_indices = @transform_1, window_bounds = array<i64: 32, 512>}, {pipeline_mode = #tpu.pipeline_mode<synchronous>, transform_indices = @transform_2, window_bounds = array<i64: 1, 512>}, {pipeline_mode = #tpu.pipeline_mode<synchronous>, transform_indices = @transform_3, window_bounds = array<i64: 512, 32>}, {pipeline_mode = #tpu.pipeline_mode<synchronous>, transform_indices = @transform_4, window_bounds = array<i64: 1, 32>}, {transform_indices = @transform_5, window_bounds = array<i64: 384, 32>}]} {
    %c0 = arith.constant 0 : index
    %c0_0 = arith.constant 0 : index
    %0 = vector.load %arg1[%c0, %c0_0] : memref<384x32xf32, #tpu.memory_space<vmem>>, vector<384x32xf32>
    %c0_1 = arith.constant 0 : index
    %c0_2 = arith.constant 0 : index
    %1 = vector.load %arg2[%c0_1, %c0_2] : memref<32x512xf32, #tpu.memory_space<vmem>>, vector<32x512xf32>
    %cst = arith.constant dense<0.000000e+00> : vector<384x512xf32>
    %2 = tpu.matmul %0, %1, %cst {dimension_numbers = #tpu.dot_dimension_numbers<[1], [0], [0], [1], [0, 0, 1, 1], [], []>} : vector<384x32xf32>, vector<32x512xf32>, vector<384x512xf32> -> vector<384x512xf32>
    %c0_3 = arith.constant 0 : index
    %c0_4 = arith.constant 0 : index
    %3 = vector.load %arg3[%c0_3, %c0_4] : memref<1x512xf32, #tpu.memory_space<vmem>>, vector<1x512xf32>
    %4 = vector.broadcast %3 : vector<1x512xf32> to vector<384x512xf32>
    %5 = arith.addf %2, %4 : vector<384x512xf32>
    %cst_5 = arith.constant 0.000000e+00 : f32
    %6 = vector.broadcast %cst_5 : f32 to vector<384x512xf32>
    %7 = arith.maximumf %5, %6 : vector<384x512xf32>
    %c0_6 = arith.constant 0 : index
    %c0_7 = arith.constant 0 : index
    %8 = vector.load %arg4[%c0_6, %c0_7] : memref<512x32xf32, #tpu.memory_space<vmem>>, vector<512x32xf32>
    %cst_8 = arith.constant dense<0.000000e+00> : vector<384x32xf32>
    %9 = tpu.matmul %7, %8, %cst_8 {dimension_numbers = #tpu.dot_dimension_numbers<[1], [0], [0], [1], [0, 0, 1, 1], [], []>} : vector<384x512xf32>, vector<512x32xf32>, vector<384x32xf32> -> vector<384x32xf32>
    %c0_9 = arith.constant 0 : index
    %c0_10 = arith.constant 0 : index
    %10 = vector.load %arg5[%c0_9, %c0_10] : memref<1x32xf32, #tpu.memory_space<vmem>>, vector<1x32xf32>
    %11 = vector.broadcast %10 : vector<1x32xf32> to vector<384x32xf32>
    %12 = arith.addf %9, %11 : vector<384x32xf32>
    %13 = arith.addf %0, %12 : vector<384x32xf32>
    %c0_11 = arith.constant 0 : index
    %c0_12 = arith.constant 0 : index
    %14 = vector.load %arg6[%c0_11, %c0_12] : memref<384x32xf32, #tpu.memory_space<vmem>>, vector<384x32xf32>
    tpu.vector_store %arg6[%c0_11, %c0_12], %13 {strides = array<i32>} : memref<384x32xf32, #tpu.memory_space<vmem>>, vector<384x32xf32>,
    return
  }
  func.func @transform_0(%arg0: i32) -> (i32, i32) {
    %c0_i32 = arith.constant 0 : i32
    %c0_i32_0 = arith.constant 0 : i32
    return %arg0, %c0_i32 : i32, i32
  }
  func.func @transform_1(%arg0: i32) -> (i32, i32) {
    %c0_i32 = arith.constant 0 : i32
    %c0_i32_0 = arith.constant 0 : i32
    %c0_i32_1 = arith.constant 0 : i32
    return %c0_i32, %c0_i32_0 : i32, i32
  }
  func.func @transform_2(%arg0: i32) -> (i32, i32) {
    %c0_i32 = arith.constant 0 : i32
    %c0_i32_0 = arith.constant 0 : i32
    %c0_i32_1 = arith.constant 0 : i32
    return %c0_i32, %c0_i32_0 : i32, i32
  }
  func.func @transform_3(%arg0: i32) -> (i32, i32) {
    %c0_i32 = arith.constant 0 : i32
    %c0_i32_0 = arith.constant 0 : i32
    %c0_i32_1 = arith.constant 0 : i32
    return %c0_i32, %c0_i32_0 : i32, i32
  }
  func.func @transform_4(%arg0: i32) -> (i32, i32) {
    %c0_i32 = arith.constant 0 : i32
    %c0_i32_0 = arith.constant 0 : i32
    %c0_i32_1 = arith.constant 0 : i32
    return %c0_i32, %c0_i32_0 : i32, i32
  }
  func.func @transform_5(%arg0: i32) -> (i32, i32) {
    %c0_i32 = arith.constant 0 : i32
    %c0_i32_0 = arith.constant 0 : i32
    return %arg0, %c0_i32 : i32, i32
  }
}

</mosaic_0001>

<llo_original>
// kernel: apply.1
$region0: #{apply.1}
  #allocation0 [shape = 'u32[]', space=smem, size = 0x4, offset = 0x4, fixed_abs, tag = 'smem constant byte address 0x4 - core index']
  #allocation1 [shape = 'u32[144,128]{1,0:T(1,128)}', space=vmem, size = 0x12000, scoped, tag = 'internal scratch']
  %s0 = inlined_call_operand.vmem [shape: f32[384,32], index: 0, kind: input, shape index: {}]
  %s1 = inlined_call_operand.vmem [shape: f32[32,512], index: 1, kind: input, shape index: {}]
  %s2 = inlined_call_operand.vmem [shape: f32[1,512], index: 2, kind: input, shape index: {}]
  %s3 = inlined_call_operand.hbm [shape: f32[512,32], index: 3, kind: input, shape index: {}]
  %s4 = inlined_call_operand.vmem [shape: f32[1,32], index: 4, kind: input, shape index: {}]
  %s5 = inlined_call_operand.vmem [shape: f32[384,32], index: 5, kind: output, shape index: {}]
  %s6 = sld [smem:[#allocation0]]
  $region34: #{apply.1} parent=0
    _
  %s8 = ssub.s32 1, %s6
  %s9 = scalar_select 0, %s8, %s6
  $region1: #{apply.1} parent=0
    #allocation2 [shape = 'u8[262144]{0}', space=vmem, size = 0x40000, scoped, tag = 'input window, operand 3, single buffered']
    #allocation3 [shape = 's32[1]{0}', space=sflag, size = 0x4, scoped, tag = 'scoped memory for apply.1']
    %10 = vsyncpa [#allocation3], 0
    // Predicated region
    $region2: #{apply.1} parent=1 // pred_check
      _
    $region3: #{apply.1} parent=1 // pred_check_branch
      %12 = sbr.rel (0) target = $region5
    $region4: #{apply.1} parent=1 // pred_region
      _
    $region5: #{apply.1} parent=1 // pred_fallthru
      _
    // Predicated region
    $region6: #{apply.1} parent=1 // pred_check
      _
    $region7: #{apply.1} parent=1 // pred_check_branch
      %14 = sbr.rel (0) target = $region9
    $region8: #{apply.1} parent=1 // pred_region
      _
    $region9: #{apply.1} parent=1 // pred_fallthru
      _
    // Predicated region
    $region10: #{apply.1} parent=1 // pred_check
      _
    $region11: #{apply.1} parent=1 // pred_check_branch
      %16 = sbr.rel (0) target = $region13
    $region12: #{apply.1} parent=1 // pred_region
      _
    $region13: #{apply.1} parent=1 // pred_fallthru
      _
    // Predicated region
    $region14: #{apply.1} parent=1 // pred_check
      _
    $region15: #{apply.1} parent=1 // pred_check_branch
      %18 = sbr.rel (0) target = $region17
    $region16: #{apply.1} parent=1 // pred_region
      %s20 = ssub.s32 8192, 8192
      %21 = vsyncadd [#allocation3], %s20
      %s22 = sshll.u32 [#allocation2], 4
      %s23 = int_to_ptr.vmem [resolvable:$true] %s22
      %28 = dma.hbm_to_vmem [thread:$0]  %s3, 8192, %s23, [#allocation3], 128, 128, 8
    $region17: #{apply.1} parent=1 // pred_fallthru
      _
    // Predicated region
    $region18: #{apply.1} parent=1 // pred_check
      _
    $region19: #{apply.1} parent=1 // pred_check_branch
      %30 = sbr.rel (0) target = $region21
    $region20: #{apply.1} parent=1 // pred_region
      _
    $region21: #{apply.1} parent=1 // pred_fallthru
      _
    // Predicated region
    $region22: #{apply.1} parent=1 // pred_check
      _
    $region23: #{apply.1} parent=1 // pred_check_branch
      %32 = sbr.rel (0) target = $region25
    $region24: #{apply.1} parent=1 // pred_region
      %33 = dma.done [#allocation3], 8192
    $region25: #{apply.1} parent=1 // pred_fallthru
      _
    %v34 = vld [vmem:[%s0] sm:$0xff]
    %v35 = vld [vmem:[%s0 + $0x8] sm:$0xff]
    %v36 = vld [vmem:[%s0 + $0x10] sm:$0xff]
    %v37 = vld [vmem:[%s0 + $0x18] sm:$0xff]
    %v38 = vld [vmem:[%s0 + $0x20] sm:$0xff]
    %v39 = vld [vmem:[%s0 + $0x28] sm:$0xff]
    %v40 = vld [vmem:[%s0 + $0x30] sm:$0xff]
    %v41 = vld [vmem:[%s0 + $0x38] sm:$0xff]
    %v42 = vld [vmem:[%s0 + $0x40] sm:$0xff]
    %v43 = vld [vmem:[%s0 + $0x48] sm:$0xff]
    %v44 = vld [vmem:[%s0 + $0x50] sm:$0xff]
    %v45 = vld [vmem:[%s0 + $0x58] sm:$0xff]
    %v46 = vld [vmem:[%s0 + $0x60] sm:$0xff]
    %v47 = vld [vmem:[%s0 + $0x68] sm:$0xff]
    %v48 = vld [vmem:[%s0 + $0x70] sm:$0xff]
    %v49 = vld [vmem:[%s0 + $0x78] sm:$0xff]
    %v50 = vld [vmem:[%s0 + $0x80] sm:$0xff]
    %v51 = vld [vmem:[%s0 + $0x88] sm:$0xff]
    %v52 = vld [vmem:[%s0 + $0x90] sm:$0xff]
    %v53 = vld [vmem:[%s0 + $0x98] sm:$0xff]
    %v54 = vld [vmem:[%s0 + $0xa0] sm:$0xff]
    %v55 = vld [vmem:[%s0 + $0xa8] sm:$0xff]
    %v56 = vld [vmem:[%s0 + $0xb0] sm:$0xff]
    %v57 = vld [vmem:[%s0 + $0xb8] sm:$0xff]
    %v58 = vld [vmem:[%s0 + $0xc0] sm:$0xff]
    %v59 = vld [vmem:[%s0 + $0xc8] sm:$0xff]
    %v60 = vld [vmem:[%s0 + $0xd0] sm:$0xff]
    %v61 = vld [vmem:[%s0 + $0xd8] sm:$0xff]
    %v62 = vld [vmem:[%s0 + $0xe0] sm:$0xff]
    %v63 = vld [vmem:[%s0 + $0xe8] sm:$0xff]
    %v64 = vld [vmem:[%s0 + $0xf0] sm:$0xff]
    %v65 = vld [vmem:[%s0 + $0xf8] sm:$0xff]
    %v66 = vld [vmem:[%s0 + $0x100] sm:$0xff]
    %v67 = vld [vmem:[%s0 + $0x108] sm:$0xff]
    %v68 = vld [vmem:[%s0 + $0x110] sm:$0xff]
    %v69 = vld [vmem:[%s0 + $0x118] sm:$0xff]
    %v70 = vld [vmem:[%s0 + $0x120] sm:$0xff]
    %v71 = vld [vmem:[%s0 + $0x128] sm:$0xff]
    %v72 = vld [vmem:[%s0 + $0x130] sm:$0xff]
    %v73 = vld [vmem:[%s0 + $0x138] sm:$0xff]
    %v74 = vld [vmem:[%s0 + $0x140] sm:$0xff]
    %v75 = vld [vmem:[%s0 + $0x148] sm:$0xff]
    %v76 = vld [vmem:[%s0 + $0x150] sm:$0xff]
    %v77 = vld [vmem:[%s0 + $0x158] sm:$0xff]
    %v78 = vld [vmem:[%s0 + $0x160] sm:$0xff]
    %v79 = vld [vmem:[%s0 + $0x168] sm:$0xff]
    %v80 = vld [vmem:[%s0 + $0x170] sm:$0xff]
    %v81 = vld [vmem:[%s0 + $0x178] sm:$0xff]
    %v82 = vld [vmem:[%s1] sm:$0xff]
    %v83 = vld [vmem:[%s1 + $0x8] sm:$0xff]
    %v84 = vld [vmem:[%s1 + $0x10] sm:$0xff]
    %v85 = vld [vmem:[%s1 + $0x18] sm:$0xff]
    %v86 = vld [vmem:[%s1 + $0x20] sm:$0xff]
    %v87 = vld [vmem:[%s1 + $0x28] sm:$0xff]
    %v88 = vld [vmem:[%s1 + $0x30] sm:$0xff]
    %v89 = vld [vmem:[%s1 + $0x38] sm:$0xff]
    %v90 = vld [vmem:[%s1 + $0x40] sm:$0xff]
    %v91 = vld [vmem:[%s1 + $0x48] sm:$0xff]
    %v92 = vld [vmem:[%s1 + $0x50] sm:$0xff]
    %v93 = vld [vmem:[%s1 + $0x58] sm:$0xff]
    %v94 = vld [vmem:[%s1 + $0x60] sm:$0xff]
    %v95 = vld [vmem:[%s1 + $0x68] sm:$0xff]
    %v96 = vld [vmem:[%s1 + $0x70] sm:$0xff]
    %v97 = vld [vmem:[%s1 + $0x78] sm:$0xff]
    %v98 = vld [vmem:[%s2] sm:$0xf]
    %v100 = vlaneseq
    %v101 = vshrl.u32 %v100, 7
    %v102 = vsub.s32 0, %v101
    %v103 = vrot.slane %v98, %v102
    %v104 = vlaneseq
    %v105 = vshrl.u32 %v104, 7
    %v106 = vsub.s32 1, %v105
    %v107 = vrot.slane %v98, %v106
    %v108 = vlaneseq
    %v109 = vshrl.u32 %v108, 7
    %v110 = vsub.s32 2, %v109
    %v111 = vrot.slane %v98, %v110
    %v112 = vlaneseq
    %v113 = vshrl.u32 %v112, 7
    %v114 = vsub.s32 3, %v113
    %v115 = vrot.slane %v98, %v114
    %vm120 = vcmask 261120
    %v122 = vsel %vm120, %v34, 0
    %v125 = vsel %vm120, %v35, 0
    %v128 = vsel %vm120, %v36, 0
    %v131 = vsel %vm120, %v37, 0
    %v134 = vsel %vm120, %v38, 0
    %v137 = vsel %vm120, %v39, 0
    %v140 = vsel %vm120, %v40, 0
    %v143 = vsel %vm120, %v41, 0
    %v146 = vsel %vm120, %v42, 0
    %v149 = vsel %vm120, %v43, 0
    %v152 = vsel %vm120, %v44, 0
    %v155 = vsel %vm120, %v45, 0
    %v158 = vsel %vm120, %v46, 0
    %v161 = vsel %vm120, %v47, 0
    %v164 = vsel %vm120, %v48, 0
    %v167 = vsel %vm120, %v49, 0
    %v170 = vsel %vm120, %v50, 0
    %v173 = vsel %vm120, %v51, 0
    %v176 = vsel %vm120, %v52, 0
    %v179 = vsel %vm120, %v53, 0
    %v182 = vsel %vm120, %v54, 0
    %v185 = vsel %vm120, %v55, 0
    %v188 = vsel %vm120, %v56, 0
    %v191 = vsel %vm120, %v57, 0
    %v194 = vsel %vm120, %v58, 0
    %v197 = vsel %vm120, %v59, 0
    %v200 = vsel %vm120, %v60, 0
    %v203 = vsel %vm120, %v61, 0
    %v206 = vsel %vm120, %v62, 0
    %v209 = vsel %vm120, %v63, 0
    %v212 = vsel %vm120, %v64, 0
    %v215 = vsel %vm120, %v65, 0
    %v218 = vsel %vm120, %v66, 0
    %v221 = vsel %vm120, %v67, 0
    %v224 = vsel %vm120, %v68, 0
    %v227 = vsel %vm120, %v69, 0
    %v230 = vsel %vm120, %v70, 0
    %v233 = vsel %vm120, %v71, 0
    %v236 = vsel %vm120, %v72, 0
    %v239 = vsel %vm120, %v73, 0
    %v242 = vsel %vm120, %v74, 0
    %v245 = vsel %vm120, %v75, 0
    %v248 = vsel %vm120, %v76, 0
    %v251 = vsel %vm120, %v77, 0
    %v254 = vsel %vm120, %v78, 0
    %v257 = vsel %vm120, %v79, 0
    %v260 = vsel %vm120, %v80, 0
    %v263 = vsel %vm120, %v81, 0
    %265 = vmatprep.subr.mxu0 %v83
    %266 = vmatpush1.msra.mxu0 %v82
    %267 = vmatprep.subr.mxu0 %v87
    %268 = vmatpush1.msra.mxu0 %v86
    %269 = vmatprep.subr.mxu0 %v91
    %270 = vmatpush1.msra.mxu0 %v90
    %271 = vmatprep.subr.mxu0 %v95
    %272 = vmatpush1.msra.mxu0 %v94
    %273 = vmatprep.subr.mxu0 0.0
    %274 = vmatpush1.msra.mxu0 0.0
    %275 = vmatprep.subr.mxu0 0.0
    %276 = vmatpush1.msra.mxu0 0.0
    %277 = vmatprep.subr.mxu0 0.0
    %278 = vmatpush1.msra.mxu0 0.0
    %279 = vmatprep.subr.mxu0 0.0
    %280 = vmatpush1.msra.mxu0 0.0
    %281 = vmatprep.subr.mxu0 0.0
    %282 = vmatpush1.msra.mxu0 0.0
    %283 = vmatprep.subr.mxu0 0.0
    %284 = vmatpush1.msra.mxu0 0.0
    %285 = vmatprep.subr.mxu0 0.0
    %286 = vmatpush1.msra.mxu0 0.0
    %287 = vmatprep.subr.mxu0 0.0
    %288 = vmatpush1.msra.mxu0 0.0
    %289 = vmatprep.subr.mxu0 0.0
    %290 = vmatpush1.msra.mxu0 0.0
    %291 = vmatprep.subr.mxu0 0.0
    %292 = vmatpush1.msra.mxu0 0.0
    %293 = vmatprep.subr.mxu0 0.0
    %294 = vmatpush1.msra.mxu0 0.0
    %295 = vmatprep.subr.mxu0 0.0
    %296 = vmatpush1.msra.mxu0 0.0
    %297 = vmatprep.subr.mxu0 0.0
    %298 = vmatpush1.msra.mxu0 0.0
    %299 = vmatprep.subr.mxu0 0.0
    %300 = vmatpush1.msra.mxu0 0.0
    %301 = vmatprep.subr.mxu0 0.0
    %302 = vmatpush1.msra.mxu0 0.0
    %303 = vmatprep.subr.mxu0 0.0
    %304 = vmatpush1.msra.mxu0 0.0
    %305 = vmatprep.subr.mxu0 0.0
    %306 = vmatpush1.msra.mxu0 0.0
    %307 = vmatprep.subr.mxu0 0.0
    %308 = vmatpush1.msra.mxu0 0.0
    %309 = vmatprep.subr.mxu0 0.0
    %310 = vmatpush1.msra.mxu0 0.0
    %311 = vmatprep.subr.mxu0 0.0
    %312 = vmatpush1.msra.mxu0 0.0
    %313 = vmatprep.subr.mxu0 0.0
    %314 = vmatpush1.msra.mxu0 0.0
    %315 = vmatprep.subr.mxu0 0.0
    %316 = vmatpush1.msra.mxu0 0.0
    %317 = vmatprep.subr.mxu0 0.0
    %318 = vmatpush1.msra.mxu0 0.0
    %319 = vmatprep.subr.mxu0 0.0
    %320 = vmatpush1.msra.mxu0 0.0
    %321 = vmatprep.subr.mxu0 0.0
    %322 = vmatpush1.msra.mxu0 0.0
    %323 = vmatprep.subr.mxu0 0.0
    %324 = vmatpush1.msra.mxu0 0.0
    %325 = vmatprep.subr.mxu0 0.0
    %326 = vmatpush1.msra.mxu0 0.0
    %327 = vmatprep.subr.mxu0 0.0
    %328 = vmatpush1.msra.mxu0 0.0
    %329 = vmatprep.mubr.f32.mxu0 0.0
    %330 = vmatmul.mubr.f32.gmra.mrb[0].mxu0 %v122
    %v331 = vpop.f32.mrb[0].mxu0
    %v332 = vadd.f32 %v103, %v331
    %v333 = vpop.f32.mrb[0].mxu0
    %v334 = vadd.f32 %v107, %v333
    %335 = vmatprep.mubr.f32.mxu0 0.0
    %336 = vmatmul.mubr.f32.gmra.mrb[0].mxu0 %v125
    %v337 = vpop.f32.mrb[0].mxu0
    %v338 = vadd.f32 %v103, %v337
    %v339 = vpop.f32.mrb[0].mxu0
    %v340 = vadd.f32 %v107, %v339
    %341 = vmatprep.mubr.f32.mxu0 0.0
    %342 = vmatmul.mubr.f32.gmra.mrb[0].mxu0 %v128
    %v343 = vpop.f32.mrb[0].mxu0
    %v344 = vadd.f32 %v103, %v343
    %v345 = vpop.f32.mrb[0].mxu0
    %v346 = vadd.f32 %v107, %v345
    %347 = vmatprep.mubr.f32.mxu0 0.0
    %348 = vmatmul.mubr.f32.gmra.mrb[0].mxu0 %v131
    %v349 = vpop.f32.mrb[0].mxu0
    %v350 = vadd.f32 %v103, %v349
    %v351 = vpop.f32.mrb[0].mxu0
    %v352 = vadd.f32 %v107, %v351
    %353 = vmatprep.mubr.f32.mxu0 0.0
    %354 = vmatmul.mubr.f32.gmra.mrb[0].mxu0 %v134
    %v355 = vpop.f32.mrb[0].mxu0
    %v356 = vadd.f32 %v103, %v355
    %v357 = vpop.f32.mrb[0].mxu0
    %v358 = vadd.f32 %v107, %v357
    %359 = vmatprep.mubr.f32.mxu0 0.0
    %360 = vmatmul.mubr.f32.gmra.mrb[0].mxu0 %v137
    %v361 = vpop.f32.mrb[0].mxu0
    %v362 = vadd.f32 %v103, %v361
    %v363 = vpop.f32.mrb[0].mxu0
    %v364 = vadd.f32 %v107, %v363
    %365 = vmatprep.mubr.f32.mxu0 0.0
    %366 = vmatmul.mubr.f32.gmra.mrb[0].mxu0 %v140
    %v367 = vpop.f32.mrb[0].mxu0
    %v368 = vadd.f32 %v103, %v367
    %v369 = vpop.f32.mrb[0].mxu0
    %v370 = vadd.f32 %v107, %v369
    %371 = vmatprep.mubr.f32.mxu0 0.0
    %372 = vmatmul.mubr.f32.gmra.mrb[0].mxu0 %v143
    %v373 = vpop.f32.mrb[0].mxu0
    %v374 = vadd.f32 %v103, %v373
    %v375 = vpop.f32.mrb[0].mxu0
    %v376 = vadd.f32 %v107, %v375
    %377 = vmatprep.mubr.f32.mxu0 0.0
    %378 = vmatmul.mubr.f32.gmra.mrb[0].mxu0 %v146
    %v379 = vpop.f32.mrb[0].mxu0
    %v380 = vadd.f32 %v103, %v379
    %v381 = vpop.f32.mrb[0].mxu0
    %v382 = vadd.f32 %v107, %v381
    %383 = vmatprep.mubr.f32.mxu0 0.0
    %384 = vmatmul.mubr.f32.gmra.mrb[0].mxu0 %v149
    %v385 = vpop.f32.mrb[0].mxu0
    %v386 = vadd.f32 %v103, %v385
    %v387 = vpop.f32.mrb[0].mxu0
    %v388 = vadd.f32 %v107, %v387
    %389 = vmatprep.mubr.f32.mxu0 0.0
    %390 = vmatmul.mubr.f32.gmra.mrb[0].mxu0 %v152
    %v391 = vpop.f32.mrb[0].mxu0
    %v392 = vadd.f32 %v103, %v391
    %v393 = vpop.f32.mrb[0].mxu0
    %v394 = vadd.f32 %v107, %v393
    %395 = vmatprep.mubr.f32.mxu0 0.0
    %396 = vmatmul.mubr.f32.gmra.mrb[0].mxu0 %v155
    %v397 = vpop.f32.mrb[0].mxu0
    %v398 = vadd.f32 %v103, %v397
    %v399 = vpop.f32.mrb[0].mxu0
    %v400 = vadd.f32 %v107, %v399
    %401 = vmatprep.mubr.f32.mxu0 0.0
    %402 = vmatmul.mubr.f32.gmra.mrb[0].mxu0 %v158
    %v403 = vpop.f32.mrb[0].mxu0
    %v404 = vadd.f32 %v103, %v403
    %v405 = vpop.f32.mrb[0].mxu0
    %v406 = vadd.f32 %v107, %v405
    %407 = vmatprep.mubr.f32.mxu0 0.0
    %408 = vmatmul.mubr.f32.gmra.mrb[0].mxu0 %v161
    %v409 = vpop.f32.mrb[0].mxu0
    %v410 = vadd.f32 %v103, %v409
    %v411 = vpop.f32.mrb[0].mxu0
    %v412 = vadd.f32 %v107, %v411
    %413 = vmatprep.mubr.f32.mxu0 0.0
    %414 = vmatmul.mubr.f32.gmra.mrb[0].mxu0 %v164
    %v415 = vpop.f32.mrb[0].mxu0
    %v416 = vadd.f32 %v103, %v415
    %v417 = vpop.f32.mrb[0].mxu0
    %v418 = vadd.f32 %v107, %v417
    %419 = vmatprep.mubr.f32.mxu0 0.0
    %420 = vmatmul.mubr.f32.gmra.mrb[0].mxu0 %v167
    %v421 = vpop.f32.mrb[0].mxu0
    %v422 = vadd.f32 %v103, %v421
    %v423 = vpop.f32.mrb[0].mxu0
    %v424 = vadd.f32 %v107, %v423
    %425 = vmatprep.mubr.f32.mxu0 0.0
    %426 = vmatmul.mubr.f32.gmra.mrb[0].mxu0 %v170
    %v427 = vpop.f32.mrb[0].mxu0
    %v428 = vadd.f32 %v103, %v427
    %v429 = vpop.f32.mrb[0].mxu0
    %v430 = vadd.f32 %v107, %v429
    %431 = vmatprep.mubr.f32.mxu0 0.0
    %432 = vmatmul.mubr.f32.gmra.mrb[0].mxu0 %v173
    %v433 = vpop.f32.mrb[0].mxu0
    %v434 = vadd.f32 %v103, %v433
    %v435 = vpop.f32.mrb[0].mxu0
    %v436 = vadd.f32 %v107, %v435
    %437 = vmatprep.mubr.f32.mxu0 0.0
    %438 = vmatmul.mubr.f32.gmra.mrb[0].mxu0 %v176
    %v439 = vpop.f32.mrb[0].mxu0
    %v440 = vadd.f32 %v103, %v439
    %v441 = vpop.f32.mrb[0].mxu0
    %v442 = vadd.f32 %v107, %v441
    %443 = vmatprep.mubr.f32.mxu0 0.0
    %444 = vmatmul.mubr.f32.gmra.mrb[0].mxu0 %v179
    %v445 = vpop.f32.mrb[0].mxu0
    %v446 = vadd.f32 %v103, %v445
    %v447 = vpop.f32.mrb[0].mxu0
    %v448 = vadd.f32 %v107, %v447
    %449 = vmatprep.mubr.f32.mxu0 0.0
    %450 = vmatmul.mubr.f32.gmra.mrb[0].mxu0 %v182
    %v451 = vpop.f32.mrb[0].mxu0
    %v452 = vadd.f32 %v103, %v451
    %v453 = vpop.f32.mrb[0].mxu0
    %v454 = vadd.f32 %v107, %v453
    %455 = vmatprep.mubr.f32.mxu0 0.0
    %456 = vmatmul.mubr.f32.gmra.mrb[0].mxu0 %v185
    %v457 = vpop.f32.mrb[0].mxu0
    %v458 = vadd.f32 %v103, %v457
    %v459 = vpop.f32.mrb[0].mxu0
    %v460 = vadd.f32 %v107, %v459
    %461 = vmatprep.mubr.f32.mxu0 0.0
    %462 = vmatmul.mubr.f32.gmra.mrb[0].mxu0 %v188
    %v463 = vpop.f32.mrb[0].mxu0
    %v464 = vadd.f32 %v103, %v463
    %v465 = vpop.f32.mrb[0].mxu0
    %v466 = vadd.f32 %v107, %v465
    %467 = vmatprep.mubr.f32.mxu0 0.0
    %468 = vmatmul.mubr.f32.gmra.mrb[0].mxu0 %v191
    %v469 = vpop.f32.mrb[0].mxu0
    %v470 = vadd.f32 %v103, %v469
    %v471 = vpop.f32.mrb[0].mxu0
    %v472 = vadd.f32 %v107, %v471
    %473 = vmatprep.mubr.f32.mxu0 0.0
    %474 = vmatmul.mubr.f32.gmra.mrb[0].mxu0 %v194
    %v475 = vpop.f32.mrb[0].mxu0
    %v476 = vadd.f32 %v103, %v475
    %v477 = vpop.f32.mrb[0].mxu0
    %v478 = vadd.f32 %v107, %v477
    %479 = vmatprep.mubr.f32.mxu0 0.0
    %480 = vmatmul.mubr.f32.gmra.mrb[0].mxu0 %v197
    %v481 = vpop.f32.mrb[0].mxu0
    %v482 = vadd.f32 %v103, %v481
    %v483 = vpop.f32.mrb[0].mxu0
    %v484 = vadd.f32 %v107, %v483
    %485 = vmatprep.mubr.f32.mxu0 0.0
    %486 = vmatmul.mubr.f32.gmra.mrb[0].mxu0 %v200
    %v487 = vpop.f32.mrb[0].mxu0
    %v488 = vadd.f32 %v103, %v487
    %v489 = vpop.f32.mrb[0].mxu0
    %v490 = vadd.f32 %v107, %v489
    %491 = vmatprep.mubr.f32.mxu0 0.0
    %492 = vmatmul.mubr.f32.gmra.mrb[0].mxu0 %v203
    %v493 = vpop.f32.mrb[0].mxu0
    %v494 = vadd.f32 %v103, %v493
    %v495 = vpop.f32.mrb[0].mxu0
    %v496 = vadd.f32 %v107, %v495
    %497 = vmatprep.mubr.f32.mxu0 0.0
    %498 = vmatmul.mubr.f32.gmra.mrb[0].mxu0 %v206
    %v499 = vpop.f32.mrb[0].mxu0
    %v500 = vadd.f32 %v103, %v499
    %v501 = vpop.f32.mrb[0].mxu0
    %v502 = vadd.f32 %v107, %v501
    %503 = vmatprep.mubr.f32.mxu0 0.0
    %504 = vmatmul.mubr.f32.gmra.mrb[0].mxu0 %v209
    %v505 = vpop.f32.mrb[0].mxu0
    %v506 = vadd.f32 %v103, %v505
    %v507 = vpop.f32.mrb[0].mxu0
    %v508 = vadd.f32 %v107, %v507
    %509 = vmatprep.mubr.f32.mxu0 0.0
    %510 = vmatmul.mubr.f32.gmra.mrb[0].mxu0 %v212
    %v511 = vpop.f32.mrb[0].mxu0
    %v512 = vadd.f32 %v103, %v511
    %v513 = vpop.f32.mrb[0].mxu0
    %v514 = vadd.f32 %v107, %v513
    %515 = vmatprep.mubr.f32.mxu0 0.0
    %516 = vmatmul.mubr.f32.gmra.mrb[0].mxu0 %v215
    %v517 = vpop.f32.mrb[0].mxu0
    %v518 = vadd.f32 %v103, %v517
    %v519 = vpop.f32.mrb[0].mxu0
    %v520 = vadd.f32 %v107, %v519
    %521 = vmatprep.mubr.f32.mxu0 0.0
    %522 = vmatmul.mubr.f32.gmra.mrb[0].mxu0 %v218
    %v523 = vpop.f32.mrb[0].mxu0
    %v524 = vadd.f32 %v103, %v523
    %v525 = vpop.f32.mrb[0].mxu0
    %v526 = vadd.f32 %v107, %v525
    %527 = vmatprep.mubr.f32.mxu0 0.0
    %528 = vmatmul.mubr.f32.gmra.mrb[0].mxu0 %v221
    %v529 = vpop.f32.mrb[0].mxu0
    %v530 = vadd.f32 %v103, %v529
    %v531 = vpop.f32.mrb[0].mxu0
    %v532 = vadd.f32 %v107, %v531
    %533 = vmatprep.mubr.f32.mxu0 0.0
    %534 = vmatmul.mubr.f32.gmra.mrb[0].mxu0 %v224
    %v535 = vpop.f32.mrb[0].mxu0
    %v536 = vadd.f32 %v103, %v535
    %v537 = vpop.f32.mrb[0].mxu0
    %v538 = vadd.f32 %v107, %v537
    %539 = vmatprep.mubr.f32.mxu0 0.0
    %540 = vmatmul.mubr.f32.gmra.mrb[0].mxu0 %v227
    %v541 = vpop.f32.mrb[0].mxu0
    %v542 = vadd.f32 %v103, %v541
    %v543 = vpop.f32.mrb[0].mxu0
    %v544 = vadd.f32 %v107, %v543
    %545 = vmatprep.mubr.f32.mxu0 0.0
    %546 = vmatmul.mubr.f32.gmra.mrb[0].mxu0 %v230
    %v547 = vpop.f32.mrb[0].mxu0
    %v548 = vadd.f32 %v103, %v547
    %v549 = vpop.f32.mrb[0].mxu0
    %v550 = vadd.f32 %v107, %v549
    %551 = vmatprep.mubr.f32.mxu0 0.0
    %552 = vmatmul.mubr.f32.gmra.mrb[0].mxu0 %v233
    %v553 = vpop.f32.mrb[0].mxu0
    %v554 = vadd.f32 %v103, %v553
    %v555 = vpop.f32.mrb[0].mxu0
    %v556 = vadd.f32 %v107, %v555
    %557 = vmatprep.mubr.f32.mxu0 0.0
    %558 = vmatmul.mubr.f32.gmra.mrb[0].mxu0 %v236
    %v559 = vpop.f32.mrb[0].mxu0
    %v560 = vadd.f32 %v103, %v559
    %v561 = vpop.f32.mrb[0].mxu0
    %v562 = vadd.f32 %v107, %v561
    %563 = vmatprep.mubr.f32.mxu0 0.0
    %564 = vmatmul.mubr.f32.gmra.mrb[0].mxu0 %v239
    %v565 = vpop.f32.mrb[0].mxu0
    %v566 = vadd.f32 %v103, %v565
    %v567 = vpop.f32.mrb[0].mxu0
    %v568 = vadd.f32 %v107, %v567
    %569 = vmatprep.mubr.f32.mxu0 0.0
    %570 = vmatmul.mubr.f32.gmra.mrb[0].mxu0 %v242
    %v571 = vpop.f32.mrb[0].mxu0
    %v572 = vadd.f32 %v103, %v571
    %v573 = vpop.f32.mrb[0].mxu0
    %v574 = vadd.f32 %v107, %v573
    %575 = vmatprep.mubr.f32.mxu0 0.0
    %576 = vmatmul.mubr.f32.gmra.mrb[0].mxu0 %v245
    %v577 = vpop.f32.mrb[0].mxu0
    %v578 = vadd.f32 %v103, %v577
    %v579 = vpop.f32.mrb[0].mxu0
    %v580 = vadd.f32 %v107, %v579
    %581 = vmatprep.mubr.f32.mxu0 0.0
    %582 = vmatmul.mubr.f32.gmra.mrb[0].mxu0 %v248
    %v583 = vpop.f32.mrb[0].mxu0
    %v584 = vadd.f32 %v103, %v583
    %v585 = vpop.f32.mrb[0].mxu0
    %v586 = vadd.f32 %v107, %v585
    %587 = vmatprep.mubr.f32.mxu0 0.0
    %588 = vmatmul.mubr.f32.gmra.mrb[0].mxu0 %v251
    %v589 = vpop.f32.mrb[0].mxu0
    %v590 = vadd.f32 %v103, %v589
    %v591 = vpop.f32.mrb[0].mxu0
    %v592 = vadd.f32 %v107, %v591
    %593 = vmatprep.mubr.f32.mxu0 0.0
    %594 = vmatmul.mubr.f32.gmra.mrb[0].mxu0 %v254
    %v595 = vpop.f32.mrb[0].mxu0
    %v596 = vadd.f32 %v103, %v595
    %v597 = vpop.f32.mrb[0].mxu0
    %v598 = vadd.f32 %v107, %v597
    %599 = vmatprep.mubr.f32.mxu0 0.0
    %600 = vmatmul.mubr.f32.gmra.mrb[0].mxu0 %v257
    %v601 = vpop.f32.mrb[0].mxu0
    %v602 = vadd.f32 %v103, %v601
    %v603 = vpop.f32.mrb[0].mxu0
    %v604 = vadd.f32 %v107, %v603
    %605 = vmatprep.mubr.f32.mxu0 0.0
    %606 = vmatmul.mubr.f32.gmra.mrb[0].mxu0 %v260
    %v607 = vpop.f32.mrb[0].mxu0
    %v608 = vadd.f32 %v103, %v607
    %v609 = vpop.f32.mrb[0].mxu0
    %v610 = vadd.f32 %v107, %v609
    %611 = vmatprep.mubr.f32.mxu0 0.0
    %612 = vmatmul.mubr.f32.gmra.mrb[0].mxu0 %v263
    %v613 = vpop.f32.mrb[0].mxu0
    %v614 = vadd.f32 %v103, %v613
    %v615 = vpop.f32.mrb[0].mxu0
    %v616 = vadd.f32 %v107, %v615
    %617 = vdwg.mxu0
    %618 = vmatprep.subr.mxu0 %v85
    %619 = vmatpush1.msra.mxu0 %v84
    %620 = vmatprep.subr.mxu0 %v89
    %621 = vmatpush1.msra.mxu0 %v88
    %622 = vmatprep.subr.mxu0 %v93
    %623 = vmatpush1.msra.mxu0 %v92
    %624 = vmatprep.subr.mxu0 %v97
    %625 = vmatpush1.msra.mxu0 %v96
    %626 = vmatprep.subr.mxu0 0.0
    %627 = vmatpush1.msra.mxu0 0.0
    %628 = vmatprep.subr.mxu0 0.0
    %629 = vmatpush1.msra.mxu0 0.0
    %630 = vmatprep.subr.mxu0 0.0
    %631 = vmatpush1.msra.mxu0 0.0
    %632 = vmatprep.subr.mxu0 0.0
    %633 = vmatpush1.msra.mxu0 0.0
    %634 = vmatprep.subr.mxu0 0.0
    %635 = vmatpush1.msra.mxu0 0.0
    %636 = vmatprep.subr.mxu0 0.0
    %637 = vmatpush1.msra.mxu0 0.0
    %638 = vmatprep.subr.mxu0 0.0
    %639 = vmatpush1.msra.mxu0 0.0
    %640 = vmatprep.subr.mxu0 0.0
    %641 = vmatpush1.msra.mxu0 0.0
    %642 = vmatprep.subr.mxu0 0.0
    %643 = vmatpush1.msra.mxu0 0.0
    %644 = vmatprep.subr.mxu0 0.0
    %645 = vmatpush1.msra.mxu0 0.0
    %646 = vmatprep.subr.mxu0 0.0
    %647 = vmatpush1.msra.mxu0 0.0
    %648 = vmatprep.subr.mxu0 0.0
    %649 = vmatpush1.msra.mxu0 0.0
    %650 = vmatprep.subr.mxu0 0.0
    %651 = vmatpush1.msra.mxu0 0.0
    %652 = vmatprep.subr.mxu0 0.0
    %653 = vmatpush1.msra.mxu0 0.0
    %654 = vmatprep.subr.mxu0 0.0
    %655 = vmatpush1.msra.mxu0 0.0
    %656 = vmatprep.subr.mxu0 0.0
    %657 = vmatpush1.msra.mxu0 0.0
    %658 = vmatprep.subr.mxu0 0.0
    %659 = vmatpush1.msra.mxu0 0.0
    %660 = vmatprep.subr.mxu0 0.0
    %661 = vmatpush1.msra.mxu0 0.0
    %662 = vmatprep.subr.mxu0 0.0
    %663 = vmatpush1.msra.mxu0 0.0
    %664 = vmatprep.subr.mxu0 0.0
    %665 = vmatpush1.msra.mxu0 0.0
    %666 = vmatprep.subr.mxu0 0.0
    %667 = vmatpush1.msra.mxu0 0.0
    %668 = vmatprep.subr.mxu0 0.0
    %669 = vmatpush1.msra.mxu0 0.0
    %670 = vmatprep.subr.mxu0 0.0
    %671 = vmatpush1.msra.mxu0 0.0
    %672 = vmatprep.subr.mxu0 0.0
    %673 = vmatpush1.msra.mxu0 0.0
    %674 = vmatprep.subr.mxu0 0.0
    %675 = vmatpush1.msra.mxu0 0.0
    %676 = vmatprep.subr.mxu0 0.0
    %677 = vmatpush1.msra.mxu0 0.0
    %678 = vmatprep.subr.mxu0 0.0
    %679 = vmatpush1.msra.mxu0 0.0
    %680 = vmatprep.subr.mxu0 0.0
    %681 = vmatpush1.msra.mxu0 0.0
    %682 = vmatprep.mubr.f32.mxu0 0.0
    %683 = vmatmul.mubr.f32.gmra.mrb[0].mxu0 %v122
    %v684 = vpop.f32.mrb[0].mxu0
    %v685 = vadd.f32 %v111, %v684
    %v686 = vpop.f32.mrb[0].mxu0
    %v687 = vadd.f32 %v115, %v686
    %688 = vmatprep.mubr.f32.mxu0 0.0
    %689 = vmatmul.mubr.f32.gmra.mrb[0].mxu0 %v125
    %v690 = vpop.f32.mrb[0].mxu0
    %v691 = vadd.f32 %v111, %v690
    %v692 = vpop.f32.mrb[0].mxu0
    %v693 = vadd.f32 %v115, %v692
    %694 = vmatprep.mubr.f32.mxu0 0.0
    %695 = vmatmul.mubr.f32.gmra.mrb[0].mxu0 %v128
    %v696 = vpop.f32.mrb[0].mxu0
    %v697 = vadd.f32 %v111, %v696
    %v698 = vpop.f32.mrb[0].mxu0
    %v699 = vadd.f32 %v115, %v698
    %700 = vmatprep.mubr.f32.mxu0 0.0
    %701 = vmatmul.mubr.f32.gmra.mrb[0].mxu0 %v131
    %v702 = vpop.f32.mrb[0].mxu0
    %v703 = vadd.f32 %v111, %v702
    %v704 = vpop.f32.mrb[0].mxu0
    %v705 = vadd.f32 %v115, %v704
    %706 = vmatprep.mubr.f32.mxu0 0.0
    %707 = vmatmul.mubr.f32.gmra.mrb[0].mxu0 %v134
    %v708 = vpop.f32.mrb[0].mxu0
    %v709 = vadd.f32 %v111, %v708
    %v710 = vpop.f32.mrb[0].mxu0
    %v711 = vadd.f32 %v115, %v710
    %712 = vmatprep.mubr.f32.mxu0 0.0
    %713 = vmatmul.mubr.f32.gmra.mrb[0].mxu0 %v137
    %v714 = vpop.f32.mrb[0].mxu0
    %v715 = vadd.f32 %v111, %v714
    %v716 = vpop.f32.mrb[0].mxu0
    %v717 = vadd.f32 %v115, %v716
    %718 = vmatprep.mubr.f32.mxu0 0.0
    %719 = vmatmul.mubr.f32.gmra.mrb[0].mxu0 %v140
    %v720 = vpop.f32.mrb[0].mxu0
    %v721 = vadd.f32 %v111, %v720
    %v722 = vpop.f32.mrb[0].mxu0
    %v723 = vadd.f32 %v115, %v722
    %724 = vmatprep.mubr.f32.mxu0 0.0
    %725 = vmatmul.mubr.f32.gmra.mrb[0].mxu0 %v143
    %v726 = vpop.f32.mrb[0].mxu0
    %v727 = vadd.f32 %v111, %v726
    %v728 = vpop.f32.mrb[0].mxu0
    %v729 = vadd.f32 %v115, %v728
    %730 = vmatprep.mubr.f32.mxu0 0.0
    %731 = vmatmul.mubr.f32.gmra.mrb[0].mxu0 %v146
    %v732 = vpop.f32.mrb[0].mxu0
    %v733 = vadd.f32 %v111, %v732
    %v734 = vpop.f32.mrb[0].mxu0
    %v735 = vadd.f32 %v115, %v734
    %736 = vmatprep.mubr.f32.mxu0 0.0
    %737 = vmatmul.mubr.f32.gmra.mrb[0].mxu0 %v149
    %v738 = vpop.f32.mrb[0].mxu0
    %v739 = vadd.f32 %v111, %v738
    %v740 = vpop.f32.mrb[0].mxu0
    %v741 = vadd.f32 %v115, %v740
    %742 = vmatprep.mubr.f32.mxu0 0.0
    %743 = vmatmul.mubr.f32.gmra.mrb[0].mxu0 %v152
    %v744 = vpop.f32.mrb[0].mxu0
    %v745 = vadd.f32 %v111, %v744
    %v746 = vpop.f32.mrb[0].mxu0
    %v747 = vadd.f32 %v115, %v746
    %748 = vmatprep.mubr.f32.mxu0 0.0
    %749 = vmatmul.mubr.f32.gmra.mrb[0].mxu0 %v155
    %v750 = vpop.f32.mrb[0].mxu0
    %v751 = vadd.f32 %v111, %v750
    %v752 = vpop.f32.mrb[0].mxu0
    %v753 = vadd.f32 %v115, %v752
    %754 = vmatprep.mubr.f32.mxu0 0.0
    %755 = vmatmul.mubr.f32.gmra.mrb[0].mxu0 %v158
    %v756 = vpop.f32.mrb[0].mxu0
    %v757 = vadd.f32 %v111, %v756
    %v758 = vpop.f32.mrb[0].mxu0
    %v759 = vadd.f32 %v115, %v758
    %760 = vmatprep.mubr.f32.mxu0 0.0
    %761 = vmatmul.mubr.f32.gmra.mrb[0].mxu0 %v161
    %v762 = vpop.f32.mrb[0].mxu0
    %v763 = vadd.f32 %v111, %v762
    %v764 = vpop.f32.mrb[0].mxu0
    %v765 = vadd.f32 %v115, %v764
    %766 = vmatprep.mubr.f32.mxu0 0.0
    %767 = vmatmul.mubr.f32.gmra.mrb[0].mxu0 %v164
    %v768 = vpop.f32.mrb[0].mxu0
    %v769 = vadd.f32 %v111, %v768
    %v770 = vpop.f32.mrb[0].mxu0
    %v771 = vadd.f32 %v115, %v770
    %772 = vmatprep.mubr.f32.mxu0 0.0
    %773 = vmatmul.mubr.f32.gmra.mrb[0].mxu0 %v167
    %v774 = vpop.f32.mrb[0].mxu0
    %v775 = vadd.f32 %v111, %v774
    %v776 = vpop.f32.mrb[0].mxu0
    %v777 = vadd.f32 %v115, %v776
    %778 = vmatprep.mubr.f32.mxu0 0.0
    %779 = vmatmul.mubr.f32.gmra.mrb[0].mxu0 %v170
    %v780 = vpop.f32.mrb[0].mxu0
    %v781 = vadd.f32 %v111, %v780
    %v782 = vpop.f32.mrb[0].mxu0
    %v783 = vadd.f32 %v115, %v782
    %784 = vmatprep.mubr.f32.mxu0 0.0
    %785 = vmatmul.mubr.f32.gmra.mrb[0].mxu0 %v173
    %v786 = vpop.f32.mrb[0].mxu0
    %v787 = vadd.f32 %v111, %v786
    %v788 = vpop.f32.mrb[0].mxu0
    %v789 = vadd.f32 %v115, %v788
    %790 = vmatprep.mubr.f32.mxu0 0.0
    %791 = vmatmul.mubr.f32.gmra.mrb[0].mxu0 %v176
    %v792 = vpop.f32.mrb[0].mxu0
    %v793 = vadd.f32 %v111, %v792
    %v794 = vpop.f32.mrb[0].mxu0
    %v795 = vadd.f32 %v115, %v794
    %796 = vmatprep.mubr.f32.mxu0 0.0
    %797 = vmatmul.mubr.f32.gmra.mrb[0].mxu0 %v179
    %v798 = vpop.f32.mrb[0].mxu0
    %v799 = vadd.f32 %v111, %v798
    %v800 = vpop.f32.mrb[0].mxu0
    %v801 = vadd.f32 %v115, %v800
    %802 = vmatprep.mubr.f32.mxu0 0.0
    %803 = vmatmul.mubr.f32.gmra.mrb[0].mxu0 %v182
    %v804 = vpop.f32.mrb[0].mxu0
    %v805 = vadd.f32 %v111, %v804
    %v806 = vpop.f32.mrb[0].mxu0
    %v807 = vadd.f32 %v115, %v806
    %808 = vmatprep.mubr.f32.mxu0 0.0
    %809 = vmatmul.mubr.f32.gmra.mrb[0].mxu0 %v185
    %v810 = vpop.f32.mrb[0].mxu0
    %v811 = vadd.f32 %v111, %v810
    %v812 = vpop.f32.mrb[0].mxu0
    %v813 = vadd.f32 %v115, %v812
    %814 = vmatprep.mubr.f32.mxu0 0.0
    %815 = vmatmul.mubr.f32.gmra.mrb[0].mxu0 %v188
    %v816 = vpop.f32.mrb[0].mxu0
    %v817 = vadd.f32 %v111, %v816
    %v818 = vpop.f32.mrb[0].mxu0
    %v819 = vadd.f32 %v115, %v818
    %820 = vmatprep.mubr.f32.mxu0 0.0
    %821 = vmatmul.mubr.f32.gmra.mrb[0].mxu0 %v191
    %v822 = vpop.f32.mrb[0].mxu0
    %v823 = vadd.f32 %v111, %v822
    %v824 = vpop.f32.mrb[0].mxu0
    %v825 = vadd.f32 %v115, %v824
    %826 = vmatprep.mubr.f32.mxu0 0.0
    %827 = vmatmul.mubr.f32.gmra.mrb[0].mxu0 %v194
    %v828 = vpop.f32.mrb[0].mxu0
    %v829 = vadd.f32 %v111, %v828
    %v830 = vpop.f32.mrb[0].mxu0
    %v831 = vadd.f32 %v115, %v830
    %832 = vmatprep.mubr.f32.mxu0 0.0
    %833 = vmatmul.mubr.f32.gmra.mrb[0].mxu0 %v197
    %v834 = vpop.f32.mrb[0].mxu0
    %v835 = vadd.f32 %v111, %v834
    %v836 = vpop.f32.mrb[0].mxu0
    %v837 = vadd.f32 %v115, %v836
    %838 = vmatprep.mubr.f32.mxu0 0.0
    %839 = vmatmul.mubr.f32.gmra.mrb[0].mxu0 %v200
    %v840 = vpop.f32.mrb[0].mxu0
    %v841 = vadd.f32 %v111, %v840
    %v842 = vpop.f32.mrb[0].mxu0
    %v843 = vadd.f32 %v115, %v842
    %844 = vmatprep.mubr.f32.mxu0 0.0
    %845 = vmatmul.mubr.f32.gmra.mrb[0].mxu0 %v203
    %v846 = vpop.f32.mrb[0].mxu0
    %v847 = vadd.f32 %v111, %v846
    %v848 = vpop.f32.mrb[0].mxu0
    %v849 = vadd.f32 %v115, %v848
    %850 = vmatprep.mubr.f32.mxu0 0.0
    %851 = vmatmul.mubr.f32.gmra.mrb[0].mxu0 %v206
    %v852 = vpop.f32.mrb[0].mxu0
    %v853 = vadd.f32 %v111, %v852
    %v854 = vpop.f32.mrb[0].mxu0
    %v855 = vadd.f32 %v115, %v854
    %856 = vmatprep.mubr.f32.mxu0 0.0
    %857 = vmatmul.mubr.f32.gmra.mrb[0].mxu0 %v209
    %v858 = vpop.f32.mrb[0].mxu0
    %v859 = vadd.f32 %v111, %v858
    %v860 = vpop.f32.mrb[0].mxu0
    %v861 = vadd.f32 %v115, %v860
    %862 = vmatprep.mubr.f32.mxu0 0.0
    %863 = vmatmul.mubr.f32.gmra.mrb[0].mxu0 %v212
    %v864 = vpop.f32.mrb[0].mxu0
    %v865 = vadd.f32 %v111, %v864
    %v866 = vpop.f32.mrb[0].mxu0
    %v867 = vadd.f32 %v115, %v866
    %868 = vmatprep.mubr.f32.mxu0 0.0
    %869 = vmatmul.mubr.f32.gmra.mrb[0].mxu0 %v215
    %v870 = vpop.f32.mrb[0].mxu0
    %v871 = vadd.f32 %v111, %v870
    %v872 = vpop.f32.mrb[0].mxu0
    %v873 = vadd.f32 %v115, %v872
    %874 = vmatprep.mubr.f32.mxu0 0.0
    %875 = vmatmul.mubr.f32.gmra.mrb[0].mxu0 %v218
    %v876 = vpop.f32.mrb[0].mxu0
    %v877 = vadd.f32 %v111, %v876
    %v878 = vpop.f32.mrb[0].mxu0
    %v879 = vadd.f32 %v115, %v878
    %880 = vmatprep.mubr.f32.mxu0 0.0
    %881 = vmatmul.mubr.f32.gmra.mrb[0].mxu0 %v221
    %v882 = vpop.f32.mrb[0].mxu0
    %v883 = vadd.f32 %v111, %v882
    %v884 = vpop.f32.mrb[0].mxu0
    %v885 = vadd.f32 %v115, %v884
    %886 = vmatprep.mubr.f32.mxu0 0.0
    %887 = vmatmul.mubr.f32.gmra.mrb[0].mxu0 %v224
    %v888 = vpop.f32.mrb[0].mxu0
    %v889 = vadd.f32 %v111, %v888
    %v890 = vpop.f32.mrb[0].mxu0
    %v891 = vadd.f32 %v115, %v890
    %892 = vmatprep.mubr.f32.mxu0 0.0
    %893 = vmatmul.mubr.f32.gmra.mrb[0].mxu0 %v227
    %v894 = vpop.f32.mrb[0].mxu0
    %v895 = vadd.f32 %v111, %v894
    %v896 = vpop.f32.mrb[0].mxu0
    %v897 = vadd.f32 %v115, %v896
    %898 = vmatprep.mubr.f32.mxu0 0.0
    %899 = vmatmul.mubr.f32.gmra.mrb[0].mxu0 %v230
    %v900 = vpop.f32.mrb[0].mxu0
    %v901 = vadd.f32 %v111, %v900
    %v902 = vpop.f32.mrb[0].mxu0
    %v903 = vadd.f32 %v115, %v902
    %904 = vmatprep.mubr.f32.mxu0 0.0
    %905 = vmatmul.mubr.f32.gmra.mrb[0].mxu0 %v233
    %v906 = vpop.f32.mrb[0].mxu0
    %v907 = vadd.f32 %v111, %v906
    %v908 = vpop.f32.mrb[0].mxu0
    %v909 = vadd.f32 %v115, %v908
    %910 = vmatprep.mubr.f32.mxu0 0.0
    %911 = vmatmul.mubr.f32.gmra.mrb[0].mxu0 %v236
    %v912 = vpop.f32.mrb[0].mxu0
    %v913 = vadd.f32 %v111, %v912
    %v914 = vpop.f32.mrb[0].mxu0
    %v915 = vadd.f32 %v115, %v914
    %916 = vmatprep.mubr.f32.mxu0 0.0
    %917 = vmatmul.mubr.f32.gmra.mrb[0].mxu0 %v239
    %v918 = vpop.f32.mrb[0].mxu0
    %v919 = vadd.f32 %v111, %v918
    %v920 = vpop.f32.mrb[0].mxu0
    %v921 = vadd.f32 %v115, %v920
    %922 = vmatprep.mubr.f32.mxu0 0.0
    %923 = vmatmul.mubr.f32.gmra.mrb[0].mxu0 %v242
    %v924 = vpop.f32.mrb[0].mxu0
    %v925 = vadd.f32 %v111, %v924
    %v926 = vpop.f32.mrb[0].mxu0
    %v927 = vadd.f32 %v115, %v926
    %928 = vmatprep.mubr.f32.mxu0 0.0
    %929 = vmatmul.mubr.f32.gmra.mrb[0].mxu0 %v245
    %v930 = vpop.f32.mrb[0].mxu0
    %v931 = vadd.f32 %v111, %v930
    %v932 = vpop.f32.mrb[0].mxu0
    %v933 = vadd.f32 %v115, %v932
    %934 = vmatprep.mubr.f32.mxu0 0.0
    %935 = vmatmul.mubr.f32.gmra.mrb[0].mxu0 %v248
    %v936 = vpop.f32.mrb[0].mxu0
    %v937 = vadd.f32 %v111, %v936
    %v938 = vpop.f32.mrb[0].mxu0
    %v939 = vadd.f32 %v115, %v938
    %940 = vmatprep.mubr.f32.mxu0 0.0
    %941 = vmatmul.mubr.f32.gmra.mrb[0].mxu0 %v251
    %v942 = vpop.f32.mrb[0].mxu0
    %v943 = vadd.f32 %v111, %v942
    %v944 = vpop.f32.mrb[0].mxu0
    %v945 = vadd.f32 %v115, %v944
    %946 = vmatprep.mubr.f32.mxu0 0.0
    %947 = vmatmul.mubr.f32.gmra.mrb[0].mxu0 %v254
    %v948 = vpop.f32.mrb[0].mxu0
    %v949 = vadd.f32 %v111, %v948
    %v950 = vpop.f32.mrb[0].mxu0
    %v951 = vadd.f32 %v115, %v950
    %952 = vmatprep.mubr.f32.mxu0 0.0
    %953 = vmatmul.mubr.f32.gmra.mrb[0].mxu0 %v257
    %v954 = vpop.f32.mrb[0].mxu0
    %v955 = vadd.f32 %v111, %v954
    %v956 = vpop.f32.mrb[0].mxu0
    %v957 = vadd.f32 %v115, %v956
    %958 = vmatprep.mubr.f32.mxu0 0.0
    %959 = vmatmul.mubr.f32.gmra.mrb[0].mxu0 %v260
    %v960 = vpop.f32.mrb[0].mxu0
    %v961 = vadd.f32 %v111, %v960
    %v962 = vpop.f32.mrb[0].mxu0
    %v963 = vadd.f32 %v115, %v962
    %964 = vmatprep.mubr.f32.mxu0 0.0
    %965 = vmatmul.mubr.f32.gmra.mrb[0].mxu0 %v263
    %v966 = vpop.f32.mrb[0].mxu0
    %v967 = vadd.f32 %v111, %v966
    %v968 = vpop.f32.mrb[0].mxu0
    %v969 = vadd.f32 %v115, %v968
    %970 = vdwg.mxu0
    %v971 = vmax.f32 %v332, 0.0
    %v972 = vmax.f32 %v334, 0.0
    %v973 = vmax.f32 %v685, 0.0
    %v974 = vmax.f32 %v687, 0.0
    %v975 = vmax.f32 %v338, 0.0
    %v976 = vmax.f32 %v340, 0.0
    %v977 = vmax.f32 %v691, 0.0
    %v978 = vmax.f32 %v693, 0.0
    %v979 = vmax.f32 %v344, 0.0
    %v980 = vmax.f32 %v346, 0.0
    %v981 = vmax.f32 %v697, 0.0
    %v982 = vmax.f32 %v699, 0.0
    %v983 = vmax.f32 %v350, 0.0
    %v984 = vmax.f32 %v352, 0.0
    %v985 = vmax.f32 %v703, 0.0
    %v986 = vmax.f32 %v705, 0.0
    %v987 = vmax.f32 %v356, 0.0
    %v988 = vmax.f32 %v358, 0.0
    %v989 = vmax.f32 %v709, 0.0
    %v990 = vmax.f32 %v711, 0.0
    %v991 = vmax.f32 %v362, 0.0
    %v992 = vmax.f32 %v364, 0.0
    %v993 = vmax.f32 %v715, 0.0
    %v994 = vmax.f32 %v717, 0.0
    %v995 = vmax.f32 %v368, 0.0
    %v996 = vmax.f32 %v370, 0.0
    %v997 = vmax.f32 %v721, 0.0
    %v998 = vmax.f32 %v723, 0.0
    %v999 = vmax.f32 %v374, 0.0
    %v1000 = vmax.f32 %v376, 0.0
    %v1001 = vmax.f32 %v727, 0.0
    %v1002 = vmax.f32 %v729, 0.0
    %v1003 = vmax.f32 %v380, 0.0
    %v1004 = vmax.f32 %v382, 0.0
    %v1005 = vmax.f32 %v733, 0.0
    %v1006 = vmax.f32 %v735, 0.0
    %v1007 = vmax.f32 %v386, 0.0
    %v1008 = vmax.f32 %v388, 0.0
    %v1009 = vmax.f32 %v739, 0.0
    %v1010 = vmax.f32 %v741, 0.0
    %v1011 = vmax.f32 %v392, 0.0
    %v1012 = vmax.f32 %v394, 0.0
    %v1013 = vmax.f32 %v745, 0.0
    %v1014 = vmax.f32 %v747, 0.0
    %v1015 = vmax.f32 %v398, 0.0
    %v1016 = vmax.f32 %v400, 0.0
    %v1017 = vmax.f32 %v751, 0.0
    %v1018 = vmax.f32 %v753, 0.0
    %v1019 = vmax.f32 %v404, 0.0
    %v1020 = vmax.f32 %v406, 0.0
    %v1021 = vmax.f32 %v757, 0.0
    %v1022 = vmax.f32 %v759, 0.0
    %v1023 = vmax.f32 %v410, 0.0
    %v1024 = vmax.f32 %v412, 0.0
    %v1025 = vmax.f32 %v763, 0.0
    %v1026 = vmax.f32 %v765, 0.0
    %v1027 = vmax.f32 %v416, 0.0
    %v1028 = vmax.f32 %v418, 0.0
    %v1029 = vmax.f32 %v769, 0.0
    %v1030 = vmax.f32 %v771, 0.0
    %v1031 = vmax.f32 %v422, 0.0
    %v1032 = vmax.f32 %v424, 0.0
    %v1033 = vmax.f32 %v775, 0.0
    %v1034 = vmax.f32 %v777, 0.0
    %v1035 = vmax.f32 %v428, 0.0
    %v1036 = vmax.f32 %v430, 0.0
    %v1037 = vmax.f32 %v781, 0.0
    %v1038 = vmax.f32 %v783, 0.0
    %v1039 = vmax.f32 %v434, 0.0
    %v1040 = vmax.f32 %v436, 0.0
    %v1041 = vmax.f32 %v787, 0.0
    %v1042 = vmax.f32 %v789, 0.0
    %v1043 = vmax.f32 %v440, 0.0
    %v1044 = vmax.f32 %v442, 0.0
    %v1045 = vmax.f32 %v793, 0.0
    %v1046 = vmax.f32 %v795, 0.0
    %v1047 = vmax.f32 %v446, 0.0
    %v1048 = vmax.f32 %v448, 0.0
    %v1049 = vmax.f32 %v799, 0.0
    %v1050 = vmax.f32 %v801, 0.0
    %v1051 = vmax.f32 %v452, 0.0
    %v1052 = vmax.f32 %v454, 0.0
    %v1053 = vmax.f32 %v805, 0.0
    %v1054 = vmax.f32 %v807, 0.0
    %v1055 = vmax.f32 %v458, 0.0
    %v1056 = vmax.f32 %v460, 0.0
    %v1057 = vmax.f32 %v811, 0.0
    %v1058 = vmax.f32 %v813, 0.0
    %v1059 = vmax.f32 %v464, 0.0
    %v1060 = vmax.f32 %v466, 0.0
    %v1061 = vmax.f32 %v817, 0.0
    %v1062 = vmax.f32 %v819, 0.0
    %v1063 = vmax.f32 %v470, 0.0
    %v1064 = vmax.f32 %v472, 0.0
    %v1065 = vmax.f32 %v823, 0.0
    %v1066 = vmax.f32 %v825, 0.0
    %v1067 = vmax.f32 %v476, 0.0
    %v1068 = vmax.f32 %v478, 0.0
    %v1069 = vmax.f32 %v829, 0.0
    %v1070 = vmax.f32 %v831, 0.0
    %v1071 = vmax.f32 %v482, 0.0
    %v1072 = vmax.f32 %v484, 0.0
    %v1073 = vmax.f32 %v835, 0.0
    %v1074 = vmax.f32 %v837, 0.0
    %v1075 = vmax.f32 %v488, 0.0
    %v1076 = vmax.f32 %v490, 0.0
    %v1077 = vmax.f32 %v841, 0.0
    %v1078 = vmax.f32 %v843, 0.0
    %v1079 = vmax.f32 %v494, 0.0
    %v1080 = vmax.f32 %v496, 0.0
    %v1081 = vmax.f32 %v847, 0.0
    %v1082 = vmax.f32 %v849, 0.0
    %v1083 = vmax.f32 %v500, 0.0
    %v1084 = vmax.f32 %v502, 0.0
    %v1085 = vmax.f32 %v853, 0.0
    %v1086 = vmax.f32 %v855, 0.0
    %v1087 = vmax.f32 %v506, 0.0
    %v1088 = vmax.f32 %v508, 0.0
    %v1089 = vmax.f32 %v859, 0.0
    %v1090 = vmax.f32 %v861, 0.0
    %v1091 = vmax.f32 %v512, 0.0
    %v1092 = vmax.f32 %v514, 0.0
    %v1093 = vmax.f32 %v865, 0.0
    %v1094 = vmax.f32 %v867, 0.0
    %v1095 = vmax.f32 %v518, 0.0
    %v1096 = vmax.f32 %v520, 0.0
    %v1097 = vmax.f32 %v871, 0.0
    %v1098 = vmax.f32 %v873, 0.0
    %v1099 = vmax.f32 %v524, 0.0
    %v1100 = vmax.f32 %v526, 0.0
    %v1101 = vmax.f32 %v877, 0.0
    %v1102 = vmax.f32 %v879, 0.0
    %v1103 = vmax.f32 %v530, 0.0
    %v1104 = vmax.f32 %v532, 0.0
    %v1105 = vmax.f32 %v883, 0.0
    %v1106 = vmax.f32 %v885, 0.0
    %v1107 = vmax.f32 %v536, 0.0
    %v1108 = vmax.f32 %v538, 0.0
    %v1109 = vmax.f32 %v889, 0.0
    %v1110 = vmax.f32 %v891, 0.0
    %v1111 = vmax.f32 %v542, 0.0
    %v1112 = vmax.f32 %v544, 0.0
    %v1113 = vmax.f32 %v895, 0.0
    %v1114 = vmax.f32 %v897, 0.0
    %v1115 = vmax.f32 %v548, 0.0
    %v1116 = vmax.f32 %v550, 0.0
    %v1117 = vmax.f32 %v901, 0.0
    %v1118 = vmax.f32 %v903, 0.0
    %v1119 = vmax.f32 %v554, 0.0
    %v1120 = vmax.f32 %v556, 0.0
    %v1121 = vmax.f32 %v907, 0.0
    %v1122 = vmax.f32 %v909, 0.0
    %v1123 = vmax.f32 %v560, 0.0
    %v1124 = vmax.f32 %v562, 0.0
    %v1125 = vmax.f32 %v913, 0.0
    %v1126 = vmax.f32 %v915, 0.0
    %v1127 = vmax.f32 %v566, 0.0
    %v1128 = vmax.f32 %v568, 0.0
    %v1129 = vmax.f32 %v919, 0.0
    %v1130 = vmax.f32 %v921, 0.0
    %v1131 = vmax.f32 %v572, 0.0
    %v1132 = vmax.f32 %v574, 0.0
    %v1133 = vmax.f32 %v925, 0.0
    %v1134 = vmax.f32 %v927, 0.0
    %v1135 = vmax.f32 %v578, 0.0
    %v1136 = vmax.f32 %v580, 0.0
    %v1137 = vmax.f32 %v931, 0.0
    %v1138 = vmax.f32 %v933, 0.0
    %v1139 = vmax.f32 %v584, 0.0
    %v1140 = vmax.f32 %v586, 0.0
    %v1141 = vmax.f32 %v937, 0.0
    %v1142 = vmax.f32 %v939, 0.0
    %v1143 = vmax.f32 %v590, 0.0
    %v1144 = vmax.f32 %v592, 0.0
    %v1145 = vmax.f32 %v943, 0.0
    %v1146 = vmax.f32 %v945, 0.0
    %v1147 = vmax.f32 %v596, 0.0
    %v1148 = vmax.f32 %v598, 0.0
    %v1149 = vmax.f32 %v949, 0.0
    %v1150 = vmax.f32 %v951, 0.0
    %v1151 = vmax.f32 %v602, 0.0
    %v1152 = vmax.f32 %v604, 0.0
    %v1153 = vmax.f32 %v955, 0.0
    %v1154 = vmax.f32 %v957, 0.0
    %v1155 = vmax.f32 %v608, 0.0
    %v1156 = vmax.f32 %v610, 0.0
    %v1157 = vmax.f32 %v961, 0.0
    %v1158 = vmax.f32 %v963, 0.0
    %v1159 = vmax.f32 %v614, 0.0
    %v1160 = vmax.f32 %v616, 0.0
    %v1161 = vmax.f32 %v967, 0.0
    %v1162 = vmax.f32 %v969, 0.0
    %v1163 = vld [vmem:[#allocation2] sm:$0xff]
    %v1164 = vld [vmem:[#allocation2 + $0x8] sm:$0xff]
    %v1165 = vld [vmem:[#allocation2 + $0x10] sm:$0xff]
    %v1166 = vld [vmem:[#allocation2 + $0x18] sm:$0xff]
    %v1167 = vld [vmem:[#allocation2 + $0x20] sm:$0xff]
    %v1168 = vld [vmem:[#allocation2 + $0x28] sm:$0xff]
    %v1169 = vld [vmem:[#allocation2 + $0x30] sm:$0xff]
    %v1170 = vld [vmem:[#allocation2 + $0x38] sm:$0xff]
    %v1171 = vld [vmem:[#allocation2 + $0x40] sm:$0xff]
    %v1172 = vld [vmem:[#allocation2 + $0x48] sm:$0xff]
    %v1173 = vld [vmem:[#allocation2 + $0x50] sm:$0xff]
    %v1174 = vld [vmem:[#allocation2 + $0x58] sm:$0xff]
    %v1175 = vld [vmem:[#allocation2 + $0x60] sm:$0xff]
    %v1176 = vld [vmem:[#allocation2 + $0x68] sm:$0xff]
    %v1177 = vld [vmem:[#allocation2 + $0x70] sm:$0xff]
    %v1178 = vld [vmem:[#allocation2 + $0x78] sm:$0xff]
    %v1179 = vld [vmem:[#allocation2 + $0x80] sm:$0xff]
    %v1180 = vld [vmem:[#allocation2 + $0x88] sm:$0xff]
    %v1181 = vld [vmem:[#allocation2 + $0x90] sm:$0xff]
    %v1182 = vld [vmem:[#allocation2 + $0x98] sm:$0xff]
    %v1183 = vld [vmem:[#allocation2 + $0xa0] sm:$0xff]
    %v1184 = vld [vmem:[#allocation2 + $0xa8] sm:$0xff]
    %v1185 = vld [vmem:[#allocation2 + $0xb0] sm:$0xff]
    %v1186 = vld [vmem:[#allocation2 + $0xb8] sm:$0xff]
    %v1187 = vld [vmem:[#allocation2 + $0xc0] sm:$0xff]
    %v1188 = vld [vmem:[#allocation2 + $0xc8] sm:$0xff]
    %v1189 = vld [vmem:[#allocation2 + $0xd0] sm:$0xff]
    %v1190 = vld [vmem:[#allocation2 + $0xd8] sm:$0xff]
    %v1191 = vld [vmem:[#allocation2 + $0xe0] sm:$0xff]
    %v1192 = vld [vmem:[#allocation2 + $0xe8] sm:$0xff]
    %v1193 = vld [vmem:[#allocation2 + $0xf0] sm:$0xff]
    %v1194 = vld [vmem:[#allocation2 + $0xf8] sm:$0xff]
    %v1195 = vld [vmem:[#allocation2 + $0x100] sm:$0xff]
    %v1196 = vld [vmem:[#allocation2 + $0x108] sm:$0xff]
    %v1197 = vld [vmem:[#allocation2 + $0x110] sm:$0xff]
    %v1198 = vld [vmem:[#allocation2 + $0x118] sm:$0xff]
    %v1199 = vld [vmem:[#allocation2 + $0x120] sm:$0xff]
    %v1200 = vld [vmem:[#allocation2 + $0x128] sm:$0xff]
    %v1201 = vld [vmem:[#allocation2 + $0x130] sm:$0xff]
    %v1202 = vld [vmem:[#allocation2 + $0x138] sm:$0xff]
    %v1203 = vld [vmem:[#allocation2 + $0x140] sm:$0xff]
    %v1204 = vld [vmem:[#allocation2 + $0x148] sm:$0xff]
    %v1205 = vld [vmem:[#allocation2 + $0x150] sm:$0xff]
    %v1206 = vld [vmem:[#allocation2 + $0x158] sm:$0xff]
    %v1207 = vld [vmem:[#allocation2 + $0x160] sm:$0xff]
    %v1208 = vld [vmem:[#allocation2 + $0x168] sm:$0xff]
    %v1209 = vld [vmem:[#allocation2 + $0x170] sm:$0xff]
    %v1210 = vld [vmem:[#allocation2 + $0x178] sm:$0xff]
    %v1211 = vld [vmem:[#allocation2 + $0x180] sm:$0xff]
    %v1212 = vld [vmem:[#allocation2 + $0x188] sm:$0xff]
    %v1213 = vld [vmem:[#allocation2 + $0x190] sm:$0xff]
    %v1214 = vld [vmem:[#allocation2 + $0x198] sm:$0xff]
    %v1215 = vld [vmem:[#allocation2 + $0x1a0] sm:$0xff]
    %v1216 = vld [vmem:[#allocation2 + $0x1a8] sm:$0xff]
    %v1217 = vld [vmem:[#allocation2 + $0x1b0] sm:$0xff]
    %v1218 = vld [vmem:[#allocation2 + $0x1b8] sm:$0xff]
    %v1219 = vld [vmem:[#allocation2 + $0x1c0] sm:$0xff]
    %v1220 = vld [vmem:[#allocation2 + $0x1c8] sm:$0xff]
    %v1221 = vld [vmem:[#allocation2 + $0x1d0] sm:$0xff]
    %v1222 = vld [vmem:[#allocation2 + $0x1d8] sm:$0xff]
    %v1223 = vld [vmem:[#allocation2 + $0x1e0] sm:$0xff]
    %v1224 = vld [vmem:[#allocation2 + $0x1e8] sm:$0xff]
    %v1225 = vld [vmem:[#allocation2 + $0x1f0] sm:$0xff]
    %v1226 = vld [vmem:[#allocation2 + $0x1f8] sm:$0xff]
    %v1227 = vld [vmem:[%s4] sm:$0x1]
    %v1229 = vlaneseq
    %v1230 = vshrl.u32 %v1229, 7
    %v1231 = vsub.s32 0, %v1230
    %v1232 = vrot.slane %v1227, %v1231
    %1234 = vmatprep.subr.mxu0 0.0
    %1235 = vmatpush1.msra.mxu0 %v1163
    %1236 = vmatprep.subr.mxu0 0.0
    %1237 = vmatpush1.msra.mxu0 %v1164
    %1238 = vmatprep.subr.mxu0 0.0
    %1239 = vmatpush1.msra.mxu0 %v1165
    %1240 = vmatprep.subr.mxu0 0.0
    %1241 = vmatpush1.msra.mxu0 %v1166
    %1242 = vmatprep.subr.mxu0 0.0
    %1243 = vmatpush1.msra.mxu0 %v1167
    %1244 = vmatprep.subr.mxu0 0.0
    %1245 = vmatpush1.msra.mxu0 %v1168
    %1246 = vmatprep.subr.mxu0 0.0
    %1247 = vmatpush1.msra.mxu0 %v1169
    %1248 = vmatprep.subr.mxu0 0.0
    %1249 = vmatpush1.msra.mxu0 %v1170
    %1250 = vmatprep.subr.mxu0 0.0
    %1251 = vmatpush1.msra.mxu0 %v1171
    %1252 = vmatprep.subr.mxu0 0.0
    %1253 = vmatpush1.msra.mxu0 %v1172
    %1254 = vmatprep.subr.mxu0 0.0
    %1255 = vmatpush1.msra.mxu0 %v1173
    %1256 = vmatprep.subr.mxu0 0.0
    %1257 = vmatpush1.msra.mxu0 %v1174
    %1258 = vmatprep.subr.mxu0 0.0
    %1259 = vmatpush1.msra.mxu0 %v1175
    %1260 = vmatprep.subr.mxu0 0.0
    %1261 = vmatpush1.msra.mxu0 %v1176
    %1262 = vmatprep.subr.mxu0 0.0
    %1263 = vmatpush1.msra.mxu0 %v1177
    %1264 = vmatprep.subr.mxu0 0.0
    %1265 = vmatpush1.msra.mxu0 %v1178
    %1266 = vmatprep.subr.mxu0 0.0
    %1267 = vmatpush1.msra.mxu0 %v1179
    %1268 = vmatprep.subr.mxu0 0.0
    %1269 = vmatpush1.msra.mxu0 %v1180
    %1270 = vmatprep.subr.mxu0 0.0
    %1271 = vmatpush1.msra.mxu0 %v1181
    %1272 = vmatprep.subr.mxu0 0.0
    %1273 = vmatpush1.msra.mxu0 %v1182
    %1274 = vmatprep.subr.mxu0 0.0
    %1275 = vmatpush1.msra.mxu0 %v1183
    %1276 = vmatprep.subr.mxu0 0.0
    %1277 = vmatpush1.msra.mxu0 %v1184
    %1278 = vmatprep.subr.mxu0 0.0
    %1279 = vmatpush1.msra.mxu0 %v1185
    %1280 = vmatprep.subr.mxu0 0.0
    %1281 = vmatpush1.msra.mxu0 %v1186
    %1282 = vmatprep.subr.mxu0 0.0
    %1283 = vmatpush1.msra.mxu0 %v1187
    %1284 = vmatprep.subr.mxu0 0.0
    %1285 = vmatpush1.msra.mxu0 %v1188
    %1286 = vmatprep.subr.mxu0 0.0
    %1287 = vmatpush1.msra.mxu0 %v1189
    %1288 = vmatprep.subr.mxu0 0.0
    %1289 = vmatpush1.msra.mxu0 %v1190
    %1290 = vmatprep.subr.mxu0 0.0
    %1291 = vmatpush1.msra.mxu0 %v1191
    %1292 = vmatprep.subr.mxu0 0.0
    %1293 = vmatpush1.msra.mxu0 %v1192
    %1294 = vmatprep.subr.mxu0 0.0
    %1295 = vmatpush1.msra.mxu0 %v1193
    %1296 = vmatprep.subr.mxu0 0.0
    %1297 = vmatpush1.msra.mxu0 %v1194
    %1298 = vmatprep.mubr.f32.mxu0 %v972
    %1299 = vmatmul.mubr.f32.gmra.mrb[0].mxu0 %v971
    %v1300 = vpop.f32.mrb[0].mxu0
    %v1301 = vadd.f32 %v1232, %v1300
    %v1302 = vpop.f32.mrb[0].mxu0
    %1303 = vmatprep.mubr.f32.mxu0 %v976
    %1304 = vmatmul.mubr.f32.gmra.mrb[0].mxu0 %v975
    %v1305 = vpop.f32.mrb[0].mxu0
    %v1306 = vadd.f32 %v1232, %v1305
    %v1307 = vpop.f32.mrb[0].mxu0
    %1308 = vmatprep.mubr.f32.mxu0 %v980
    %1309 = vmatmul.mubr.f32.gmra.mrb[0].mxu0 %v979
    %v1310 = vpop.f32.mrb[0].mxu0
    %v1311 = vadd.f32 %v1232, %v1310
    %v1312 = vpop.f32.mrb[0].mxu0
    %1313 = vmatprep.mubr.f32.mxu0 %v984
    %1314 = vmatmul.mubr.f32.gmra.mrb[0].mxu0 %v983
    %v1315 = vpop.f32.mrb[0].mxu0
    %v1316 = vadd.f32 %v1232, %v1315
    %v1317 = vpop.f32.mrb[0].mxu0
    %1318 = vmatprep.mubr.f32.mxu0 %v988
    %1319 = vmatmul.mubr.f32.gmra.mrb[0].mxu0 %v987
    %v1320 = vpop.f32.mrb[0].mxu0
    %v1321 = vadd.f32 %v1232, %v1320
    %v1322 = vpop.f32.mrb[0].mxu0
    %1323 = vmatprep.mubr.f32.mxu0 %v992
    %1324 = vmatmul.mubr.f32.gmra.mrb[0].mxu0 %v991
    %v1325 = vpop.f32.mrb[0].mxu0
    %v1326 = vadd.f32 %v1232, %v1325
    %v1327 = vpop.f32.mrb[0].mxu0
    %1328 = vmatprep.mubr.f32.mxu0 %v996
    %1329 = vmatmul.mubr.f32.gmra.mrb[0].mxu0 %v995
    %v1330 = vpop.f32.mrb[0].mxu0
    %v1331 = vadd.f32 %v1232, %v1330
    %v1332 = vpop.f32.mrb[0].mxu0
    %1333 = vmatprep.mubr.f32.mxu0 %v1000
    %1334 = vmatmul.mubr.f32.gmra.mrb[0].mxu0 %v999
    %v1335 = vpop.f32.mrb[0].mxu0
    %v1336 = vadd.f32 %v1232, %v1335
    %v1337 = vpop.f32.mrb[0].mxu0
    %1338 = vmatprep.mubr.f32.mxu0 %v1004
    %1339 = vmatmul.mubr.f32.gmra.mrb[0].mxu0 %v1003
    %v1340 = vpop.f32.mrb[0].mxu0
    %v1341 = vadd.f32 %v1232, %v1340
    %v1342 = vpop.f32.mrb[0].mxu0
    %1343 = vmatprep.mubr.f32.mxu0 %v1008
    %1344 = vmatmul.mubr.f32.gmra.mrb[0].mxu0 %v1007
    %v1345 = vpop.f32.mrb[0].mxu0
    %v1346 = vadd.f32 %v1232, %v1345
    %v1347 = vpop.f32.mrb[0].mxu0
    %1348 = vmatprep.mubr.f32.mxu0 %v1012
    %1349 = vmatmul.mubr.f32.gmra.mrb[0].mxu0 %v1011
    %v1350 = vpop.f32.mrb[0].mxu0
    %v1351 = vadd.f32 %v1232, %v1350
    %v1352 = vpop.f32.mrb[0].mxu0
    %1353 = vmatprep.mubr.f32.mxu0 %v1016
    %1354 = vmatmul.mubr.f32.gmra.mrb[0].mxu0 %v1015
    %v1355 = vpop.f32.mrb[0].mxu0
    %v1356 = vadd.f32 %v1232, %v1355
    %v1357 = vpop.f32.mrb[0].mxu0
    %1358 = vmatprep.mubr.f32.mxu0 %v1020
    %1359 = vmatmul.mubr.f32.gmra.mrb[0].mxu0 %v1019
    %v1360 = vpop.f32.mrb[0].mxu0
    %v1361 = vadd.f32 %v1232, %v1360
    %v1362 = vpop.f32.mrb[0].mxu0
    %1363 = vmatprep.mubr.f32.mxu0 %v1024
    %1364 = vmatmul.mubr.f32.gmra.mrb[0].mxu0 %v1023
    %v1365 = vpop.f32.mrb[0].mxu0
    %v1366 = vadd.f32 %v1232, %v1365
    %v1367 = vpop.f32.mrb[0].mxu0
    %1368 = vmatprep.mubr.f32.mxu0 %v1028
    %1369 = vmatmul.mubr.f32.gmra.mrb[0].mxu0 %v1027
    %v1370 = vpop.f32.mrb[0].mxu0
    %v1371 = vadd.f32 %v1232, %v1370
    %v1372 = vpop.f32.mrb[0].mxu0
    %1373 = vmatprep.mubr.f32.mxu0 %v1032
    %1374 = vmatmul.mubr.f32.gmra.mrb[0].mxu0 %v1031
    %v1375 = vpop.f32.mrb[0].mxu0
    %v1376 = vadd.f32 %v1232, %v1375
    %v1377 = vpop.f32.mrb[0].mxu0
    %1378 = vmatprep.mubr.f32.mxu0 %v1036
    %1379 = vmatmul.mubr.f32.gmra.mrb[0].mxu0 %v1035
    %v1380 = vpop.f32.mrb[0].mxu0
    %v1381 = vadd.f32 %v1232, %v1380
    %v1382 = vpop.f32.mrb[0].mxu0
    %1383 = vmatprep.mubr.f32.mxu0 %v1040
    %1384 = vmatmul.mubr.f32.gmra.mrb[0].mxu0 %v1039
    %v1385 = vpop.f32.mrb[0].mxu0
    %v1386 = vadd.f32 %v1232, %v1385
    %v1387 = vpop.f32.mrb[0].mxu0
    %1388 = vmatprep.mubr.f32.mxu0 %v1044
    %1389 = vmatmul.mubr.f32.gmra.mrb[0].mxu0 %v1043
    %v1390 = vpop.f32.mrb[0].mxu0
    %v1391 = vadd.f32 %v1232, %v1390
    %v1392 = vpop.f32.mrb[0].mxu0
    %1393 = vmatprep.mubr.f32.mxu0 %v1048
    %1394 = vmatmul.mubr.f32.gmra.mrb[0].mxu0 %v1047
    %v1395 = vpop.f32.mrb[0].mxu0
    %v1396 = vadd.f32 %v1232, %v1395
    %v1397 = vpop.f32.mrb[0].mxu0
    %1398 = vmatprep.mubr.f32.mxu0 %v1052
    %1399 = vmatmul.mubr.f32.gmra.mrb[0].mxu0 %v1051
    %v1400 = vpop.f32.mrb[0].mxu0
    %v1401 = vadd.f32 %v1232, %v1400
    %v1402 = vpop.f32.mrb[0].mxu0
    %1403 = vmatprep.mubr.f32.mxu0 %v1056
    %1404 = vmatmul.mubr.f32.gmra.mrb[0].mxu0 %v1055
    %v1405 = vpop.f32.mrb[0].mxu0
    %v1406 = vadd.f32 %v1232, %v1405
    %v1407 = vpop.f32.mrb[0].mxu0
    %1408 = vmatprep.mubr.f32.mxu0 %v1060
    %1409 = vmatmul.mubr.f32.gmra.mrb[0].mxu0 %v1059
    %v1410 = vpop.f32.mrb[0].mxu0
    %v1411 = vadd.f32 %v1232, %v1410
    %v1412 = vpop.f32.mrb[0].mxu0
    %1413 = vmatprep.mubr.f32.mxu0 %v1064
    %1414 = vmatmul.mubr.f32.gmra.mrb[0].mxu0 %v1063
    %v1415 = vpop.f32.mrb[0].mxu0
    %v1416 = vadd.f32 %v1232, %v1415
    %v1417 = vpop.f32.mrb[0].mxu0
    %1418 = vmatprep.mubr.f32.mxu0 %v1068
    %1419 = vmatmul.mubr.f32.gmra.mrb[0].mxu0 %v1067
    %v1420 = vpop.f32.mrb[0].mxu0
    %v1421 = vadd.f32 %v1232, %v1420
    %v1422 = vpop.f32.mrb[0].mxu0
    %1423 = vmatprep.mubr.f32.mxu0 %v1072
    %1424 = vmatmul.mubr.f32.gmra.mrb[0].mxu0 %v1071
    %v1425 = vpop.f32.mrb[0].mxu0
    %v1426 = vadd.f32 %v1232, %v1425
    %v1427 = vpop.f32.mrb[0].mxu0
    %1428 = vmatprep.mubr.f32.mxu0 %v1076
    %1429 = vmatmul.mubr.f32.gmra.mrb[0].mxu0 %v1075
    %v1430 = vpop.f32.mrb[0].mxu0
    %v1431 = vadd.f32 %v1232, %v1430
    %v1432 = vpop.f32.mrb[0].mxu0
    %1433 = vmatprep.mubr.f32.mxu0 %v1080
    %1434 = vmatmul.mubr.f32.gmra.mrb[0].mxu0 %v1079
    %v1435 = vpop.f32.mrb[0].mxu0
    %v1436 = vadd.f32 %v1232, %v1435
    %v1437 = vpop.f32.mrb[0].mxu0
    %1438 = vmatprep.mubr.f32.mxu0 %v1084
    %1439 = vmatmul.mubr.f32.gmra.mrb[0].mxu0 %v1083
    %v1440 = vpop.f32.mrb[0].mxu0
    %v1441 = vadd.f32 %v1232, %v1440
    %v1442 = vpop.f32.mrb[0].mxu0
    %1443 = vmatprep.mubr.f32.mxu0 %v1088
    %1444 = vmatmul.mubr.f32.gmra.mrb[0].mxu0 %v1087
    %v1445 = vpop.f32.mrb[0].mxu0
    %v1446 = vadd.f32 %v1232, %v1445
    %v1447 = vpop.f32.mrb[0].mxu0
    %1448 = vmatprep.mubr.f32.mxu0 %v1092
    %1449 = vmatmul.mubr.f32.gmra.mrb[0].mxu0 %v1091
    %v1450 = vpop.f32.mrb[0].mxu0
    %v1451 = vadd.f32 %v1232, %v1450
    %v1452 = vpop.f32.mrb[0].mxu0
    %1453 = vmatprep.mubr.f32.mxu0 %v1096
    %1454 = vmatmul.mubr.f32.gmra.mrb[0].mxu0 %v1095
    %v1455 = vpop.f32.mrb[0].mxu0
    %v1456 = vadd.f32 %v1232, %v1455
    %v1457 = vpop.f32.mrb[0].mxu0
    %1458 = vmatprep.mubr.f32.mxu0 %v1100
    %1459 = vmatmul.mubr.f32.gmra.mrb[0].mxu0 %v1099
    %v1460 = vpop.f32.mrb[0].mxu0
    %v1461 = vadd.f32 %v1232, %v1460
    %v1462 = vpop.f32.mrb[0].mxu0
    %1463 = vmatprep.mubr.f32.mxu0 %v1104
    %1464 = vmatmul.mubr.f32.gmra.mrb[0].mxu0 %v1103
    %v1465 = vpop.f32.mrb[0].mxu0
    %v1466 = vadd.f32 %v1232, %v1465
    %v1467 = vpop.f32.mrb[0].mxu0
    %1468 = vmatprep.mubr.f32.mxu0 %v1108
    %1469 = vmatmul.mubr.f32.gmra.mrb[0].mxu0 %v1107
    %v1470 = vpop.f32.mrb[0].mxu0
    %v1471 = vadd.f32 %v1232, %v1470
    %v1472 = vpop.f32.mrb[0].mxu0
    %1473 = vmatprep.mubr.f32.mxu0 %v1112
    %1474 = vmatmul.mubr.f32.gmra.mrb[0].mxu0 %v1111
    %v1475 = vpop.f32.mrb[0].mxu0
    %v1476 = vadd.f32 %v1232, %v1475
    %v1477 = vpop.f32.mrb[0].mxu0
    %1478 = vmatprep.mubr.f32.mxu0 %v1116
    %1479 = vmatmul.mubr.f32.gmra.mrb[0].mxu0 %v1115
    %v1480 = vpop.f32.mrb[0].mxu0
    %v1481 = vadd.f32 %v1232, %v1480
    %v1482 = vpop.f32.mrb[0].mxu0
    %1483 = vmatprep.mubr.f32.mxu0 %v1120
    %1484 = vmatmul.mubr.f32.gmra.mrb[0].mxu0 %v1119
    %v1485 = vpop.f32.mrb[0].mxu0
    %v1486 = vadd.f32 %v1232, %v1485
    %v1487 = vpop.f32.mrb[0].mxu0
    %1488 = vmatprep.mubr.f32.mxu0 %v1124
    %1489 = vmatmul.mubr.f32.gmra.mrb[0].mxu0 %v1123
    %v1490 = vpop.f32.mrb[0].mxu0
    %v1491 = vadd.f32 %v1232, %v1490
    %v1492 = vpop.f32.mrb[0].mxu0
    %1493 = vmatprep.mubr.f32.mxu0 %v1128
    %1494 = vmatmul.mubr.f32.gmra.mrb[0].mxu0 %v1127
    %v1495 = vpop.f32.mrb[0].mxu0
    %v1496 = vadd.f32 %v1232, %v1495
    %v1497 = vpop.f32.mrb[0].mxu0
    %1498 = vmatprep.mubr.f32.mxu0 %v1132
    %1499 = vmatmul.mubr.f32.gmra.mrb[0].mxu0 %v1131
    %v1500 = vpop.f32.mrb[0].mxu0
    %v1501 = vadd.f32 %v1232, %v1500
    %v1502 = vpop.f32.mrb[0].mxu0
    %1503 = vmatprep.mubr.f32.mxu0 %v1136
    %1504 = vmatmul.mubr.f32.gmra.mrb[0].mxu0 %v1135
    %v1505 = vpop.f32.mrb[0].mxu0
    %v1506 = vadd.f32 %v1232, %v1505
    %v1507 = vpop.f32.mrb[0].mxu0
    %1508 = vmatprep.mubr.f32.mxu0 %v1140
    %1509 = vmatmul.mubr.f32.gmra.mrb[0].mxu0 %v1139
    %v1510 = vpop.f32.mrb[0].mxu0
    %v1511 = vadd.f32 %v1232, %v1510
    %v1512 = vpop.f32.mrb[0].mxu0
    %1513 = vmatprep.mubr.f32.mxu0 %v1144
    %1514 = vmatmul.mubr.f32.gmra.mrb[0].mxu0 %v1143
    %v1515 = vpop.f32.mrb[0].mxu0
    %v1516 = vadd.f32 %v1232, %v1515
    %v1517 = vpop.f32.mrb[0].mxu0
    %1518 = vmatprep.mubr.f32.mxu0 %v1148
    %1519 = vmatmul.mubr.f32.gmra.mrb[0].mxu0 %v1147
    %v1520 = vpop.f32.mrb[0].mxu0
    %v1521 = vadd.f32 %v1232, %v1520
    %v1522 = vpop.f32.mrb[0].mxu0
    %1523 = vmatprep.mubr.f32.mxu0 %v1152
    %1524 = vmatmul.mubr.f32.gmra.mrb[0].mxu0 %v1151
    %v1525 = vpop.f32.mrb[0].mxu0
    %v1526 = vadd.f32 %v1232, %v1525
    %v1527 = vpop.f32.mrb[0].mxu0
    %1528 = vmatprep.mubr.f32.mxu0 %v1156
    %1529 = vmatmul.mubr.f32.gmra.mrb[0].mxu0 %v1155
    %v1530 = vpop.f32.mrb[0].mxu0
    %v1531 = vadd.f32 %v1232, %v1530
    %v1532 = vpop.f32.mrb[0].mxu0
    %1533 = vmatprep.mubr.f32.mxu0 %v1160
    %1534 = vmatmul.mubr.f32.gmra.mrb[0].mxu0 %v1159
    %v1535 = vpop.f32.mrb[0].mxu0
    %v1536 = vadd.f32 %v1232, %v1535
    %v1537 = vpop.f32.mrb[0].mxu0
    %1538 = vdwg.mxu0
    %1539 = vmatprep.subr.mxu0 0.0
    %1540 = vmatpush1.msra.mxu0 %v1195
    %1541 = vmatprep.subr.mxu0 0.0
    %1542 = vmatpush1.msra.mxu0 %v1196
    %1543 = vmatprep.subr.mxu0 0.0
    %1544 = vmatpush1.msra.mxu0 %v1197
    %1545 = vmatprep.subr.mxu0 0.0
    %1546 = vmatpush1.msra.mxu0 %v1198
    %1547 = vmatprep.subr.mxu0 0.0
    %1548 = vmatpush1.msra.mxu0 %v1199
    %1549 = vmatprep.subr.mxu0 0.0
    %1550 = vmatpush1.msra.mxu0 %v1200
    %1551 = vmatprep.subr.mxu0 0.0
    %1552 = vmatpush1.msra.mxu0 %v1201
    %1553 = vmatprep.subr.mxu0 0.0
    %1554 = vmatpush1.msra.mxu0 %v1202
    %1555 = vmatprep.subr.mxu0 0.0
    %1556 = vmatpush1.msra.mxu0 %v1203
    %1557 = vmatprep.subr.mxu0 0.0
    %1558 = vmatpush1.msra.mxu0 %v1204
    %1559 = vmatprep.subr.mxu0 0.0
    %1560 = vmatpush1.msra.mxu0 %v1205
    %1561 = vmatprep.subr.mxu0 0.0
    %1562 = vmatpush1.msra.mxu0 %v1206
    %1563 = vmatprep.subr.mxu0 0.0
    %1564 = vmatpush1.msra.mxu0 %v1207
    %1565 = vmatprep.subr.mxu0 0.0
    %1566 = vmatpush1.msra.mxu0 %v1208
    %1567 = vmatprep.subr.mxu0 0.0
    %1568 = vmatpush1.msra.mxu0 %v1209
    %1569 = vmatprep.subr.mxu0 0.0
    %1570 = vmatpush1.msra.mxu0 %v1210
    %1571 = vmatprep.subr.mxu0 0.0
    %1572 = vmatpush1.msra.mxu0 %v1211
    %1573 = vmatprep.subr.mxu0 0.0
    %1574 = vmatpush1.msra.mxu0 %v1212
    %1575 = vmatprep.subr.mxu0 0.0
    %1576 = vmatpush1.msra.mxu0 %v1213
    %1577 = vmatprep.subr.mxu0 0.0
    %1578 = vmatpush1.msra.mxu0 %v1214
    %1579 = vmatprep.subr.mxu0 0.0
    %1580 = vmatpush1.msra.mxu0 %v1215
    %1581 = vmatprep.subr.mxu0 0.0
    %1582 = vmatpush1.msra.mxu0 %v1216
    %1583 = vmatprep.subr.mxu0 0.0
    %1584 = vmatpush1.msra.mxu0 %v1217
    %1585 = vmatprep.subr.mxu0 0.0
    %1586 = vmatpush1.msra.mxu0 %v1218
    %1587 = vmatprep.subr.mxu0 0.0
    %1588 = vmatpush1.msra.mxu0 %v1219
    %1589 = vmatprep.subr.mxu0 0.0
    %1590 = vmatpush1.msra.mxu0 %v1220
    %1591 = vmatprep.subr.mxu0 0.0
    %1592 = vmatpush1.msra.mxu0 %v1221
    %1593 = vmatprep.subr.mxu0 0.0
    %1594 = vmatpush1.msra.mxu0 %v1222
    %1595 = vmatprep.subr.mxu0 0.0
    %1596 = vmatpush1.msra.mxu0 %v1223
    %1597 = vmatprep.subr.mxu0 0.0
    %1598 = vmatpush1.msra.mxu0 %v1224
    %1599 = vmatprep.subr.mxu0 0.0
    %1600 = vmatpush1.msra.mxu0 %v1225
    %1601 = vmatprep.subr.mxu0 0.0
    %1602 = vmatpush1.msra.mxu0 %v1226
    %1603 = vmatprep.mubr.f32.mxu0 %v974
    %1604 = vmatmul.mubr.f32.gmra.mrb[0].mxu0 %v973
    %v1605 = vpop.f32.mrb[0].mxu0
    %v1606 = vadd.f32 %v1301, %v1605
    %v1607 = vpop.f32.mrb[0].mxu0
    %1608 = vmatprep.mubr.f32.mxu0 %v978
    %1609 = vmatmul.mubr.f32.gmra.mrb[0].mxu0 %v977
    %v1610 = vpop.f32.mrb[0].mxu0
    %v1611 = vadd.f32 %v1306, %v1610
    %v1612 = vpop.f32.mrb[0].mxu0
    %1613 = vmatprep.mubr.f32.mxu0 %v982
    %1614 = vmatmul.mubr.f32.gmra.mrb[0].mxu0 %v981
    %v1615 = vpop.f32.mrb[0].mxu0
    %v1616 = vadd.f32 %v1311, %v1615
    %v1617 = vpop.f32.mrb[0].mxu0
    %1618 = vmatprep.mubr.f32.mxu0 %v986
    %1619 = vmatmul.mubr.f32.gmra.mrb[0].mxu0 %v985
    %v1620 = vpop.f32.mrb[0].mxu0
    %v1621 = vadd.f32 %v1316, %v1620
    %v1622 = vpop.f32.mrb[0].mxu0
    %1623 = vmatprep.mubr.f32.mxu0 %v990
    %1624 = vmatmul.mubr.f32.gmra.mrb[0].mxu0 %v989
    %v1625 = vpop.f32.mrb[0].mxu0
    %v1626 = vadd.f32 %v1321, %v1625
    %v1627 = vpop.f32.mrb[0].mxu0
    %1628 = vmatprep.mubr.f32.mxu0 %v994
    %1629 = vmatmul.mubr.f32.gmra.mrb[0].mxu0 %v993
    %v1630 = vpop.f32.mrb[0].mxu0
    %v1631 = vadd.f32 %v1326, %v1630
    %v1632 = vpop.f32.mrb[0].mxu0
    %1633 = vmatprep.mubr.f32.mxu0 %v998
    %1634 = vmatmul.mubr.f32.gmra.mrb[0].mxu0 %v997
    %v1635 = vpop.f32.mrb[0].mxu0
    %v1636 = vadd.f32 %v1331, %v1635
    %v1637 = vpop.f32.mrb[0].mxu0
    %1638 = vmatprep.mubr.f32.mxu0 %v1002
    %1639 = vmatmul.mubr.f32.gmra.mrb[0].mxu0 %v1001
    %v1640 = vpop.f32.mrb[0].mxu0
    %v1641 = vadd.f32 %v1336, %v1640
    %v1642 = vpop.f32.mrb[0].mxu0
    %1643 = vmatprep.mubr.f32.mxu0 %v1006
    %1644 = vmatmul.mubr.f32.gmra.mrb[0].mxu0 %v1005
    %v1645 = vpop.f32.mrb[0].mxu0
    %v1646 = vadd.f32 %v1341, %v1645
    %v1647 = vpop.f32.mrb[0].mxu0
    %1648 = vmatprep.mubr.f32.mxu0 %v1010
    %1649 = vmatmul.mubr.f32.gmra.mrb[0].mxu0 %v1009
    %v1650 = vpop.f32.mrb[0].mxu0
    %v1651 = vadd.f32 %v1346, %v1650
    %v1652 = vpop.f32.mrb[0].mxu0
    %1653 = vmatprep.mubr.f32.mxu0 %v1014
    %1654 = vmatmul.mubr.f32.gmra.mrb[0].mxu0 %v1013
    %v1655 = vpop.f32.mrb[0].mxu0
    %v1656 = vadd.f32 %v1351, %v1655
    %v1657 = vpop.f32.mrb[0].mxu0
    %1658 = vmatprep.mubr.f32.mxu0 %v1018
    %1659 = vmatmul.mubr.f32.gmra.mrb[0].mxu0 %v1017
    %v1660 = vpop.f32.mrb[0].mxu0
    %v1661 = vadd.f32 %v1356, %v1660
    %v1662 = vpop.f32.mrb[0].mxu0
    %1663 = vmatprep.mubr.f32.mxu0 %v1022
    %1664 = vmatmul.mubr.f32.gmra.mrb[0].mxu0 %v1021
    %v1665 = vpop.f32.mrb[0].mxu0
    %v1666 = vadd.f32 %v1361, %v1665
    %v1667 = vpop.f32.mrb[0].mxu0
    %1668 = vmatprep.mubr.f32.mxu0 %v1026
    %1669 = vmatmul.mubr.f32.gmra.mrb[0].mxu0 %v1025
    %v1670 = vpop.f32.mrb[0].mxu0
    %v1671 = vadd.f32 %v1366, %v1670
    %v1672 = vpop.f32.mrb[0].mxu0
    %1673 = vmatprep.mubr.f32.mxu0 %v1030
    %1674 = vmatmul.mubr.f32.gmra.mrb[0].mxu0 %v1029
    %v1675 = vpop.f32.mrb[0].mxu0
    %v1676 = vadd.f32 %v1371, %v1675
    %v1677 = vpop.f32.mrb[0].mxu0
    %1678 = vmatprep.mubr.f32.mxu0 %v1034
    %1679 = vmatmul.mubr.f32.gmra.mrb[0].mxu0 %v1033
    %v1680 = vpop.f32.mrb[0].mxu0
    %v1681 = vadd.f32 %v1376, %v1680
    %v1682 = vpop.f32.mrb[0].mxu0
    %1683 = vmatprep.mubr.f32.mxu0 %v1038
    %1684 = vmatmul.mubr.f32.gmra.mrb[0].mxu0 %v1037
    %v1685 = vpop.f32.mrb[0].mxu0
    %v1686 = vadd.f32 %v1381, %v1685
    %v1687 = vpop.f32.mrb[0].mxu0
    %1688 = vmatprep.mubr.f32.mxu0 %v1042
    %1689 = vmatmul.mubr.f32.gmra.mrb[0].mxu0 %v1041
    %v1690 = vpop.f32.mrb[0].mxu0
    %v1691 = vadd.f32 %v1386, %v1690
    %v1692 = vpop.f32.mrb[0].mxu0
    %1693 = vmatprep.mubr.f32.mxu0 %v1046
    %1694 = vmatmul.mubr.f32.gmra.mrb[0].mxu0 %v1045
    %v1695 = vpop.f32.mrb[0].mxu0
    %v1696 = vadd.f32 %v1391, %v1695
    %v1697 = vpop.f32.mrb[0].mxu0
    %1698 = vmatprep.mubr.f32.mxu0 %v1050
    %1699 = vmatmul.mubr.f32.gmra.mrb[0].mxu0 %v1049
    %v1700 = vpop.f32.mrb[0].mxu0
    %v1701 = vadd.f32 %v1396, %v1700
    %v1702 = vpop.f32.mrb[0].mxu0
    %1703 = vmatprep.mubr.f32.mxu0 %v1054
    %1704 = vmatmul.mubr.f32.gmra.mrb[0].mxu0 %v1053
    %v1705 = vpop.f32.mrb[0].mxu0
    %v1706 = vadd.f32 %v1401, %v1705
    %v1707 = vpop.f32.mrb[0].mxu0
    %1708 = vmatprep.mubr.f32.mxu0 %v1058
    %1709 = vmatmul.mubr.f32.gmra.mrb[0].mxu0 %v1057
    %v1710 = vpop.f32.mrb[0].mxu0
    %v1711 = vadd.f32 %v1406, %v1710
    %v1712 = vpop.f32.mrb[0].mxu0
    %1713 = vmatprep.mubr.f32.mxu0 %v1062
    %1714 = vmatmul.mubr.f32.gmra.mrb[0].mxu0 %v1061
    %v1715 = vpop.f32.mrb[0].mxu0
    %v1716 = vadd.f32 %v1411, %v1715
    %v1717 = vpop.f32.mrb[0].mxu0
    %1718 = vmatprep.mubr.f32.mxu0 %v1066
    %1719 = vmatmul.mubr.f32.gmra.mrb[0].mxu0 %v1065
    %v1720 = vpop.f32.mrb[0].mxu0
    %v1721 = vadd.f32 %v1416, %v1720
    %v1722 = vpop.f32.mrb[0].mxu0
    %1723 = vmatprep.mubr.f32.mxu0 %v1070
    %1724 = vmatmul.mubr.f32.gmra.mrb[0].mxu0 %v1069
    %v1725 = vpop.f32.mrb[0].mxu0
    %v1726 = vadd.f32 %v1421, %v1725
    %v1727 = vpop.f32.mrb[0].mxu0
    %1728 = vmatprep.mubr.f32.mxu0 %v1074
    %1729 = vmatmul.mubr.f32.gmra.mrb[0].mxu0 %v1073
    %v1730 = vpop.f32.mrb[0].mxu0
    %v1731 = vadd.f32 %v1426, %v1730
    %v1732 = vpop.f32.mrb[0].mxu0
    %1733 = vmatprep.mubr.f32.mxu0 %v1078
    %1734 = vmatmul.mubr.f32.gmra.mrb[0].mxu0 %v1077
    %v1735 = vpop.f32.mrb[0].mxu0
    %v1736 = vadd.f32 %v1431, %v1735
    %v1737 = vpop.f32.mrb[0].mxu0
    %1738 = vmatprep.mubr.f32.mxu0 %v1082
    %1739 = vmatmul.mubr.f32.gmra.mrb[0].mxu0 %v1081
    %v1740 = vpop.f32.mrb[0].mxu0
    %v1741 = vadd.f32 %v1436, %v1740
    %v1742 = vpop.f32.mrb[0].mxu0
    %1743 = vmatprep.mubr.f32.mxu0 %v1086
    %1744 = vmatmul.mubr.f32.gmra.mrb[0].mxu0 %v1085
    %v1745 = vpop.f32.mrb[0].mxu0
    %v1746 = vadd.f32 %v1441, %v1745
    %v1747 = vpop.f32.mrb[0].mxu0
    %1748 = vmatprep.mubr.f32.mxu0 %v1090
    %1749 = vmatmul.mubr.f32.gmra.mrb[0].mxu0 %v1089
    %v1750 = vpop.f32.mrb[0].mxu0
    %v1751 = vadd.f32 %v1446, %v1750
    %v1752 = vpop.f32.mrb[0].mxu0
    %1753 = vmatprep.mubr.f32.mxu0 %v1094
    %1754 = vmatmul.mubr.f32.gmra.mrb[0].mxu0 %v1093
    %v1755 = vpop.f32.mrb[0].mxu0
    %v1756 = vadd.f32 %v1451, %v1755
    %v1757 = vpop.f32.mrb[0].mxu0
    %1758 = vmatprep.mubr.f32.mxu0 %v1098
    %1759 = vmatmul.mubr.f32.gmra.mrb[0].mxu0 %v1097
    %v1760 = vpop.f32.mrb[0].mxu0
    %v1761 = vadd.f32 %v1456, %v1760
    %v1762 = vpop.f32.mrb[0].mxu0
    %1763 = vmatprep.mubr.f32.mxu0 %v1102
    %1764 = vmatmul.mubr.f32.gmra.mrb[0].mxu0 %v1101
    %v1765 = vpop.f32.mrb[0].mxu0
    %v1766 = vadd.f32 %v1461, %v1765
    %v1767 = vpop.f32.mrb[0].mxu0
    %1768 = vmatprep.mubr.f32.mxu0 %v1106
    %1769 = vmatmul.mubr.f32.gmra.mrb[0].mxu0 %v1105
    %v1770 = vpop.f32.mrb[0].mxu0
    %v1771 = vadd.f32 %v1466, %v1770
    %v1772 = vpop.f32.mrb[0].mxu0
    %1773 = vmatprep.mubr.f32.mxu0 %v1110
    %1774 = vmatmul.mubr.f32.gmra.mrb[0].mxu0 %v1109
    %v1775 = vpop.f32.mrb[0].mxu0
    %v1776 = vadd.f32 %v1471, %v1775
    %v1777 = vpop.f32.mrb[0].mxu0
    %1778 = vmatprep.mubr.f32.mxu0 %v1114
    %1779 = vmatmul.mubr.f32.gmra.mrb[0].mxu0 %v1113
    %v1780 = vpop.f32.mrb[0].mxu0
    %v1781 = vadd.f32 %v1476, %v1780
    %v1782 = vpop.f32.mrb[0].mxu0
    %1783 = vmatprep.mubr.f32.mxu0 %v1118
    %1784 = vmatmul.mubr.f32.gmra.mrb[0].mxu0 %v1117
    %v1785 = vpop.f32.mrb[0].mxu0
    %v1786 = vadd.f32 %v1481, %v1785
    %v1787 = vpop.f32.mrb[0].mxu0
    %1788 = vmatprep.mubr.f32.mxu0 %v1122
    %1789 = vmatmul.mubr.f32.gmra.mrb[0].mxu0 %v1121
    %v1790 = vpop.f32.mrb[0].mxu0
    %v1791 = vadd.f32 %v1486, %v1790
    %v1792 = vpop.f32.mrb[0].mxu0
    %1793 = vmatprep.mubr.f32.mxu0 %v1126
    %1794 = vmatmul.mubr.f32.gmra.mrb[0].mxu0 %v1125
    %v1795 = vpop.f32.mrb[0].mxu0
    %v1796 = vadd.f32 %v1491, %v1795
    %v1797 = vpop.f32.mrb[0].mxu0
    %1798 = vmatprep.mubr.f32.mxu0 %v1130
    %1799 = vmatmul.mubr.f32.gmra.mrb[0].mxu0 %v1129
    %v1800 = vpop.f32.mrb[0].mxu0
    %v1801 = vadd.f32 %v1496, %v1800
    %v1802 = vpop.f32.mrb[0].mxu0
    %1803 = vmatprep.mubr.f32.mxu0 %v1134
    %1804 = vmatmul.mubr.f32.gmra.mrb[0].mxu0 %v1133
    %v1805 = vpop.f32.mrb[0].mxu0
    %v1806 = vadd.f32 %v1501, %v1805
    %v1807 = vpop.f32.mrb[0].mxu0
    %1808 = vmatprep.mubr.f32.mxu0 %v1138
    %1809 = vmatmul.mubr.f32.gmra.mrb[0].mxu0 %v1137
    %v1810 = vpop.f32.mrb[0].mxu0
    %v1811 = vadd.f32 %v1506, %v1810
    %v1812 = vpop.f32.mrb[0].mxu0
    %1813 = vmatprep.mubr.f32.mxu0 %v1142
    %1814 = vmatmul.mubr.f32.gmra.mrb[0].mxu0 %v1141
    %v1815 = vpop.f32.mrb[0].mxu0
    %v1816 = vadd.f32 %v1511, %v1815
    %v1817 = vpop.f32.mrb[0].mxu0
    %1818 = vmatprep.mubr.f32.mxu0 %v1146
    %1819 = vmatmul.mubr.f32.gmra.mrb[0].mxu0 %v1145
    %v1820 = vpop.f32.mrb[0].mxu0
    %v1821 = vadd.f32 %v1516, %v1820
    %v1822 = vpop.f32.mrb[0].mxu0
    %1823 = vmatprep.mubr.f32.mxu0 %v1150
    %1824 = vmatmul.mubr.f32.gmra.mrb[0].mxu0 %v1149
    %v1825 = vpop.f32.mrb[0].mxu0
    %v1826 = vadd.f32 %v1521, %v1825
    %v1827 = vpop.f32.mrb[0].mxu0
    %1828 = vmatprep.mubr.f32.mxu0 %v1154
    %1829 = vmatmul.mubr.f32.gmra.mrb[0].mxu0 %v1153
    %v1830 = vpop.f32.mrb[0].mxu0
    %v1831 = vadd.f32 %v1526, %v1830
    %v1832 = vpop.f32.mrb[0].mxu0
    %1833 = vmatprep.mubr.f32.mxu0 %v1158
    %1834 = vmatmul.mubr.f32.gmra.mrb[0].mxu0 %v1157
    %v1835 = vpop.f32.mrb[0].mxu0
    %v1836 = vadd.f32 %v1531, %v1835
    %v1837 = vpop.f32.mrb[0].mxu0
    %1838 = vmatprep.mubr.f32.mxu0 %v1162
    %1839 = vmatmul.mubr.f32.gmra.mrb[0].mxu0 %v1161
    %v1840 = vpop.f32.mrb[0].mxu0
    %v1841 = vadd.f32 %v1536, %v1840
    %v1842 = vpop.f32.mrb[0].mxu0
    %1843 = vdwg.mxu0
    %v1844 = vadd.f32 %v34, %v1606
    %v1845 = vadd.f32 %v35, %v1611
    %v1846 = vadd.f32 %v36, %v1616
    %v1847 = vadd.f32 %v37, %v1621
    %v1848 = vadd.f32 %v38, %v1626
    %v1849 = vadd.f32 %v39, %v1631
    %v1850 = vadd.f32 %v40, %v1636
    %v1851 = vadd.f32 %v41, %v1641
    %v1852 = vadd.f32 %v42, %v1646
    %v1853 = vadd.f32 %v43, %v1651
    %v1854 = vadd.f32 %v44, %v1656
    %v1855 = vadd.f32 %v45, %v1661
    %v1856 = vadd.f32 %v46, %v1666
    %v1857 = vadd.f32 %v47, %v1671
    %v1858 = vadd.f32 %v48, %v1676
    %v1859 = vadd.f32 %v49, %v1681
    %v1860 = vadd.f32 %v50, %v1686
    %v1861 = vadd.f32 %v51, %v1691
    %v1862 = vadd.f32 %v52, %v1696
    %v1863 = vadd.f32 %v53, %v1701
    %v1864 = vadd.f32 %v54, %v1706
    %v1865 = vadd.f32 %v55, %v1711
    %v1866 = vadd.f32 %v56, %v1716
    %v1867 = vadd.f32 %v57, %v1721
    %v1868 = vadd.f32 %v58, %v1726
    %v1869 = vadd.f32 %v59, %v1731
    %v1870 = vadd.f32 %v60, %v1736
    %v1871 = vadd.f32 %v61, %v1741
    %v1872 = vadd.f32 %v62, %v1746
    %v1873 = vadd.f32 %v63, %v1751
    %v1874 = vadd.f32 %v64, %v1756
    %v1875 = vadd.f32 %v65, %v1761
    %v1876 = vadd.f32 %v66, %v1766
    %v1877 = vadd.f32 %v67, %v1771
    %v1878 = vadd.f32 %v68, %v1776
    %v1879 = vadd.f32 %v69, %v1781
    %v1880 = vadd.f32 %v70, %v1786
    %v1881 = vadd.f32 %v71, %v1791
    %v1882 = vadd.f32 %v72, %v1796
    %v1883 = vadd.f32 %v73, %v1801
    %v1884 = vadd.f32 %v74, %v1806
    %v1885 = vadd.f32 %v75, %v1811
    %v1886 = vadd.f32 %v76, %v1816
    %v1887 = vadd.f32 %v77, %v1821
    %v1888 = vadd.f32 %v78, %v1826
    %v1889 = vadd.f32 %v79, %v1831
    %v1890 = vadd.f32 %v80, %v1836
    %v1891 = vadd.f32 %v81, %v1841
    %1892 = vst.msk [vmem:[%s5] sm:$0xff] %vm120, %v1844
    %1893 = vst.msk [vmem:[%s5 + $0x8] sm:$0xff] %vm120, %v1845
    %1894 = vst.msk [vmem:[%s5 + $0x10] sm:$0xff] %vm120, %v1846
    %1895 = vst.msk [vmem:[%s5 + $0x18] sm:$0xff] %vm120, %v1847
    %1896 = vst.msk [vmem:[%s5 + $0x20] sm:$0xff] %vm120, %v1848
    %1897 = vst.msk [vmem:[%s5 + $0x28] sm:$0xff] %vm120, %v1849
    %1898 = vst.msk [vmem:[%s5 + $0x30] sm:$0xff] %vm120, %v1850
    %1899 = vst.msk [vmem:[%s5 + $0x38] sm:$0xff] %vm120, %v1851
    %1900 = vst.msk [vmem:[%s5 + $0x40] sm:$0xff] %vm120, %v1852
    %1901 = vst.msk [vmem:[%s5 + $0x48] sm:$0xff] %vm120, %v1853
    %1902 = vst.msk [vmem:[%s5 + $0x50] sm:$0xff] %vm120, %v1854
    %1903 = vst.msk [vmem:[%s5 + $0x58] sm:$0xff] %vm120, %v1855
    %1904 = vst.msk [vmem:[%s5 + $0x60] sm:$0xff] %vm120, %v1856
    %1905 = vst.msk [vmem:[%s5 + $0x68] sm:$0xff] %vm120, %v1857
    %1906 = vst.msk [vmem:[%s5 + $0x70] sm:$0xff] %vm120, %v1858
    %1907 = vst.msk [vmem:[%s5 + $0x78] sm:$0xff] %vm120, %v1859
    %1908 = vst.msk [vmem:[%s5 + $0x80] sm:$0xff] %vm120, %v1860
    %1909 = vst.msk [vmem:[%s5 + $0x88] sm:$0xff] %vm120, %v1861
    %1910 = vst.msk [vmem:[%s5 + $0x90] sm:$0xff] %vm120, %v1862
    %1911 = vst.msk [vmem:[%s5 + $0x98] sm:$0xff] %vm120, %v1863
    %1912 = vst.msk [vmem:[%s5 + $0xa0] sm:$0xff] %vm120, %v1864
    %1913 = vst.msk [vmem:[%s5 + $0xa8] sm:$0xff] %vm120, %v1865
    %1914 = vst.msk [vmem:[%s5 + $0xb0] sm:$0xff] %vm120, %v1866
    %1915 = vst.msk [vmem:[%s5 + $0xb8] sm:$0xff] %vm120, %v1867
    %1916 = vst.msk [vmem:[%s5 + $0xc0] sm:$0xff] %vm120, %v1868
    %1917 = vst.msk [vmem:[%s5 + $0xc8] sm:$0xff] %vm120, %v1869
    %1918 = vst.msk [vmem:[%s5 + $0xd0] sm:$0xff] %vm120, %v1870
    %1919 = vst.msk [vmem:[%s5 + $0xd8] sm:$0xff] %vm120, %v1871
    %1920 = vst.msk [vmem:[%s5 + $0xe0] sm:$0xff] %vm120, %v1872
    %1921 = vst.msk [vmem:[%s5 + $0xe8] sm:$0xff] %vm120, %v1873
    %1922 = vst.msk [vmem:[%s5 + $0xf0] sm:$0xff] %vm120, %v1874
    %1923 = vst.msk [vmem:[%s5 + $0xf8] sm:$0xff] %vm120, %v1875
    %1924 = vst.msk [vmem:[%s5 + $0x100] sm:$0xff] %vm120, %v1876
    %1925 = vst.msk [vmem:[%s5 + $0x108] sm:$0xff] %vm120, %v1877
    %1926 = vst.msk [vmem:[%s5 + $0x110] sm:$0xff] %vm120, %v1878
    %1927 = vst.msk [vmem:[%s5 + $0x118] sm:$0xff] %vm120, %v1879
    %1928 = vst.msk [vmem:[%s5 + $0x120] sm:$0xff] %vm120, %v1880
    %1929 = vst.msk [vmem:[%s5 + $0x128] sm:$0xff] %vm120, %v1881
    %1930 = vst.msk [vmem:[%s5 + $0x130] sm:$0xff] %vm120, %v1882
    %1931 = vst.msk [vmem:[%s5 + $0x138] sm:$0xff] %vm120, %v1883
    %1932 = vst.msk [vmem:[%s5 + $0x140] sm:$0xff] %vm120, %v1884
    %1933 = vst.msk [vmem:[%s5 + $0x148] sm:$0xff] %vm120, %v1885
    %1934 = vst.msk [vmem:[%s5 + $0x150] sm:$0xff] %vm120, %v1886
    %1935 = vst.msk [vmem:[%s5 + $0x158] sm:$0xff] %vm120, %v1887
    %1936 = vst.msk [vmem:[%s5 + $0x160] sm:$0xff] %vm120, %v1888
    %1937 = vst.msk [vmem:[%s5 + $0x168] sm:$0xff] %vm120, %v1889
    %1938 = vst.msk [vmem:[%s5 + $0x170] sm:$0xff] %vm120, %v1890
    %1939 = vst.msk [vmem:[%s5 + $0x178] sm:$0xff] %vm120, %v1891
    // Predicated region
    $region26: #{apply.1} parent=1 // pred_check
      _
    $region27: #{apply.1} parent=1 // pred_check_branch
      %1941 = sbr.rel (0) target = $region29
    $region28: #{apply.1} parent=1 // pred_region
      _
    $region29: #{apply.1} parent=1 // pred_fallthru
      _
    // Predicated region
    $region30: #{apply.1} parent=1 // pred_check
      _
    $region31: #{apply.1} parent=1 // pred_check_branch
      %1943 = sbr.rel (0) target = $region33
    $region32: #{apply.1} parent=1 // pred_region
      _
    $region33: #{apply.1} parent=1 // pred_fallthru
      _
    %1944 = vsyncpa [#allocation3], 1

</llo_original>
